<compile_context>
chip_gen: v7x
topology: tpu7x:2x2x1
jax: 0.10.0
libtpu: 0.0.40
codegen_flags: <defaults>
</compile_context>

<pallas_src>
import jax
import jax.numpy as jnp
from jax.experimental import pallas as pl
from jax.experimental.pallas import tpu as pltpu


def _round_up(x, m):
    return (x + m - 1) // m * m


def _pad_gate_cols(w, h, hp):
    """(..., 4*h) -> (..., 4*hp); gate k (PyTorch order i,f,g,o) is moved to the
    lane-aligned column offset k*hp so in-kernel gate slices never cut a 128-lane vreg."""
    pad_cfg = [(0, 0)] * (w.ndim - 1) + [(0, hp - h)]
    parts = [jnp.pad(w[..., k * h:(k + 1) * h], pad_cfg) for k in range(4)]
    return jnp.concatenate(parts, axis=-1)


def _sigmoid_via_tanh(x):
    # sigmoid(x) == 0.5 * (tanh(0.5 * x) + 1): single EUP op + VPU FMA (no exp + recip).
    return 0.5 * jnp.tanh(0.5 * x) + 0.5


# ---------------------------------------------------------------------------
# Parallel tiled matmul + bias (used for the hoisted input / fc projections)
# ---------------------------------------------------------------------------
def _matmul_bias_kernel(x_ref, w_ref, b_ref, o_ref, acc_ref):
    @pl.when(pl.program_id(2) == 0)
    def _():
        acc_ref[...] = jnp.zeros_like(acc_ref)

    acc_ref[...] += jnp.dot(x_ref[...], w_ref[...],
                            preferred_element_type=jnp.float32)

    @pl.when(pl.program_id(2) == pl.num_programs(2) - 1)
    def _():
        o_ref[...] = (acc_ref[...] + b_ref[...]).astype(o_ref.dtype)


def _matmul_bias(x, w, b, *, out_dtype=jnp.float32):
    """out = x @ w + b.  x:(M,K), w:(K,N), b:(1,N).

    Streamed operands (x, w) are cast to bf16 (halves HBM traffic, native MXU rate);
    accumulation and the bias add stay f32.  Tile plan per perf review:
      tk = min(round_up(K,128), 512)  -> K grid collapses to 1 for K <= 512
      tm, tn = 256-multiples up to 512 (MXU 2x256^2 on v6e/v7x, HBM roofline)."""
    M, K = x.shape
    _, N = w.shape
    tm = min(_round_up(M, 256), 512)
    tn = min(_round_up(N, 256), 512)
    tk = min(_round_up(K, 128), 512)
    Mp, Kp, Np = _round_up(M, tm), _round_up(K, tk), _round_up(N, tn)

    x_p = jnp.pad(x, ((0, Mp - M), (0, Kp - K))).astype(jnp.bfloat16)
    w_p = jnp.pad(w, ((0, Kp - K), (0, Np - N))).astype(jnp.bfloat16)
    b_p = jnp.pad(b.reshape(1, -1), ((0, 0), (0, Np - N))).astype(jnp.float32)

    out = pl.pallas_call(
        _matmul_bias_kernel,
        out_shape=jax.ShapeDtypeStruct((Mp, Np), out_dtype),
        grid_spec=pltpu.PrefetchScalarGridSpec(
            num_scalar_prefetch=0,
            grid=(Mp // tm, Np // tn, Kp // tk),
            in_specs=[
                pl.BlockSpec((tm, tk), lambda i, j, k: (i, k)),
                pl.BlockSpec((tk, tn), lambda i, j, k: (k, j)),
                pl.BlockSpec((1, tn), lambda i, j, k: (0, j)),
            ],
            out_specs=pl.BlockSpec((tm, tn), lambda i, j, k: (i, j)),
            scratch_shapes=[pltpu.VMEM((tm, tn), jnp.float32)],
        ),
        compiler_params=pltpu.CompilerParams(
            dimension_semantics=("parallel", "parallel", "arbitrary"),
            vmem_limit_bytes=32 * 1024 * 1024),
    )(x_p, w_p, b_p)
    return out[:M, :N]


# ---------------------------------------------------------------------------
# Sequential LSTM recurrence: t_blk timesteps per grid iteration.
# Input gate partials already contain x @ W_ih + (b_ih + b_hh) (bf16 stream).
# ---------------------------------------------------------------------------
def _lstm_recurrent_kernel(gp_ref, whh_ref, out_ref, h_ref, c_ref):
    """gp_ref : (t_blk, Bp, 4*Hp) bf16  precomputed gate partials (lane-aligned gates)
       whh_ref: (Hp, 4*Hp)        bf16  hidden->gates weight (transposed, resident)
       out_ref: (t_blk, Bp, Hp)   bf16  lstm hidden outputs
       h_ref, c_ref: (Bp, Hp)     f32   VMEM scratch carrying state across grid steps
    """
    @pl.when(pl.program_id(0) == 0)
    def _():
        # self.hidden = (zeros, zeros) in the PyTorch forward
        h_ref[...] = jnp.zeros_like(h_ref)
        c_ref[...] = jnp.zeros_like(c_ref)

    t_blk = gp_ref.shape[0]
    hp = h_ref.shape[-1]
    whh = whh_ref[...]                      # bf16, grid-invariant (single-buffered)

    def step(t, carry):
        h, c = carry                        # f32 recurrent state
        gates = gp_ref[t].astype(jnp.float32) + jnp.dot(
            h.astype(jnp.bfloat16), whh, preferred_element_type=jnp.float32)
        # lane-aligned gate slices (offsets are multiples of 128)
        i_g = _sigmoid_via_tanh(gates[:, 0 * hp:1 * hp])
        f_g = _sigmoid_via_tanh(gates[:, 1 * hp:2 * hp])
        g_g = jnp.tanh(gates[:, 2 * hp:3 * hp])
        o_g = _sigmoid_via_tanh(gates[:, 3 * hp:4 * hp])
        c_new = f_g * c + i_g * g_g
        h_new = o_g * jnp.tanh(c_new)
        out_ref[t] = h_new.astype(out_ref.dtype)
        return (h_new, c_new)

    # TODO(synk): at production Bp/Hp (e.g. 128x512) verify unroll=True does not spill
    # (drop to unroll=2 or a rolled loop if ld/st slot utilization shows spill traffic).
    h_fin, c_fin = jax.lax.fori_loop(0, t_blk, step,
                                     (h_ref[...], c_ref[...]), unroll=True)
    h_ref[...] = h_fin
    c_ref[...] = c_fin


def _lstm_recurrence(gate_part, whh, *, Tp, Bp, Hp, t_blk, whh_pipeline_mode):
    whh_spec_kwargs = {}
    if whh_pipeline_mode is not None:
        # Grid-invariant weight: single-buffer it (default double-buffering wastes a
        # full copy of W_hh in VMEM; matters most on v7x 64 MiB / v5e 16 MiB scoped).
        whh_spec_kwargs["pipeline_mode"] = whh_pipeline_mode
    return pl.pallas_call(
        _lstm_recurrent_kernel,
        out_shape=jax.ShapeDtypeStruct((Tp, Bp, Hp), jnp.bfloat16),
        grid_spec=pltpu.PrefetchScalarGridSpec(
            num_scalar_prefetch=0,
            grid=(Tp // t_blk,),
            in_specs=[
                pl.BlockSpec((t_blk, Bp, 4 * Hp), lambda i: (i, 0, 0)),   # gate partials
                pl.BlockSpec((Hp, 4 * Hp), lambda i: (0, 0),              # W_hh resident
                             **whh_spec_kwargs),
            ],
            out_specs=pl.BlockSpec((t_blk, Bp, Hp), lambda i: (i, 0, 0)),
            scratch_shapes=[pltpu.VMEM((Bp, Hp), jnp.float32),            # h state (f32)
                            pltpu.VMEM((Bp, Hp), jnp.float32)],           # c state (f32)
        ),
        compiler_params=pltpu.CompilerParams(
            dimension_semantics=("arbitrary",),        # true recurrence - stays sequential
            vmem_limit_bytes=32 * 1024 * 1024),
    )(gate_part, whh)


# ---------------------------------------------------------------------------
# Full forward pass
# ---------------------------------------------------------------------------
def decoder_rnn_forward(features, captions, params, *, t_blk=16):
    """features: (B, E) float32, captions: (B, S) int32 -> logits (B, S, V) float32."""
    emb_table = params["embedding"]          # (V, E)
    w_ih_t = params["w_ih_t"]                # (E, 4H)
    w_hh_t = params["w_hh_t"]                # (H, 4H)
    b_gates = params["b_gates"]              # (1, 4H) = b_ih + b_hh
    w_fc_t = params["w_fc_t"]                # (H, V)
    b_fc = params["b_fc"]                    # (1, V)

    B, E = features.shape
    H = w_hh_t.shape[0]
    V = w_fc_t.shape[1]

    # Glue (XLA): embedding gather + concat of image features as timestep 0.
    emb = jnp.take(emb_table, captions[:, :-1], axis=0)          # (B, S-1, E)
    x = jnp.concatenate([features[:, None, :], emb], axis=1)     # (B, T,   E)
    T = x.shape[1]

    # Padding: lane-align gates (H -> multiple of 128), pad batch to 8 sublanes,
    # pad T to a multiple of the per-grid-step time block.
    Hp = _round_up(H, 128)
    Bp = _round_up(B, 8)
    t_blk = max(8, min(t_blk, _round_up(T, 8)))
    Tp = _round_up(T, t_blk)

    w_ih_g = _pad_gate_cols(w_ih_t, H, Hp)                                   # (E, 4Hp)
    w_hh_g = jnp.pad(_pad_gate_cols(w_hh_t, H, Hp), ((0, Hp - H), (0, 0)))   # (Hp, 4Hp)
    b_g = _pad_gate_cols(b_gates, H, Hp)                                     # (1, 4Hp)
    w_fc_p = jnp.pad(w_fc_t, ((0, Hp - H), (0, 0)))                          # (Hp, V)

    # Time-major, batch/time padded input.
    x_tm = jnp.transpose(x, (1, 0, 2))                                       # (T, B, E)
    x_tm = jnp.pad(x_tm, ((0, Tp - T), (0, Bp - B), (0, 0)))                 # (Tp, Bp, E)

    # 1) Hoisted input projection (+ fused bias): one parallel bf16 matmul, f32 accumulate.
    gate_part = _matmul_bias(x_tm.reshape(Tp * Bp, E), w_ih_g, b_g,
                             out_dtype=jnp.bfloat16)                         # (Tp*Bp, 4Hp)
    gate_part = gate_part.reshape(Tp, Bp, 4 * Hp)

    # 2) Sequential recurrence: only h @ W_hh + gate math per step (f32 state, bf16 stream).
    # TODO(synk): recurrence MXU utilization is ~Bp/256 at tiny batch; pack sequences/beams
    # to Bp>=128 (v5e) / 256 (v6e/v7x) or hold W_hh weight-stationary via matmul_push_rhs.
    whh_bf16 = w_hh_g.astype(jnp.bfloat16)
    try:
        lstm_out = jax.block_until_ready(
            _lstm_recurrence(gate_part, whh_bf16, Tp=Tp, Bp=Bp, Hp=Hp, t_blk=t_blk,
                             whh_pipeline_mode=pl.Buffered(1)))
    except Exception:
        # Fallback if this Pallas build rejects single-buffering on pallas_call BlockSpecs:
        # default double-buffered W_hh (still correct, slightly more VMEM).
        lstm_out = _lstm_recurrence(gate_part, whh_bf16, Tp=Tp, Bp=Bp, Hp=Hp, t_blk=t_blk,
                                    whh_pipeline_mode=None)

    # 3) Hoisted fc projection: one parallel bf16 matmul over all (t, b) rows, f32 logits.
    # TODO(synk): on v7x, consider fusing the fc per t_blk block into the recurrence
    # epilogue with a resident bf16 W_fc (V-tiled) to skip the lstm_out HBM round-trip.
    logits = _matmul_bias(lstm_out.reshape(Tp * Bp, Hp), w_fc_p, b_fc,
                          out_dtype=jnp.float32)                             # (Tp*Bp, V)
    logits = logits.reshape(Tp, Bp, V)[:T, :B]

    return jnp.transpose(logits, (1, 0, 2))                                  # (B, T, V)


# ---------------------------------------------------------------------------
# Pure-JAX f32 reference (lax.scan LSTM) to validate the kernels
# ---------------------------------------------------------------------------
def _reference_forward(features, captions, params):
    emb = jnp.take(params["embedding"], captions[:, :-1], axis=0)
    x = jnp.concatenate([features[:, None, :], emb], axis=1)
    H = params["w_hh_t"].shape[0]
    B = x.shape[0]

    def step(carry, x_t):
        h, c = carry
        gates = x_t @ params["w_ih_t"] + h @ params["w_hh_t"] + params["b_gates"]
        i = jax.nn.sigmoid(gates[:, 0 * H:1 * H])
        f = jax.nn.sigmoid(gates[:, 1 * H:2 * H])
        g = jnp.tanh(gates[:, 2 * H:3 * H])
        o = jax.nn.sigmoid(gates[:, 3 * H:4 * H])
        c_new = f * c + i * g
        h_new = o * jnp.tanh(c_new)
        return (h_new, c_new), h_new

    init = (jnp.zeros((B, H), jnp.float32), jnp.zeros((B, H), jnp.float32))
    _, hs = jax.lax.scan(step, init, jnp.transpose(x, (1, 0, 2)))
    lstm_out = jnp.transpose(hs, (1, 0, 2))
    return lstm_out @ params["w_fc_t"] + params["b_fc"]


def init_params(key, embed_size, hidden_size, vocab_size):
    ks = jax.random.split(key, 7)
    scale = 0.1
    return {
        "embedding": scale * jax.random.normal(ks[0], (vocab_size, embed_size), jnp.float32),
        # stored pre-transposed for the kernels; PyTorch gate order (i, f, g, o)
        "w_ih_t": scale * jax.random.normal(ks[1], (embed_size, 4 * hidden_size), jnp.float32),
        "w_hh_t": scale * jax.random.normal(ks[2], (hidden_size, 4 * hidden_size), jnp.float32),
        "b_gates": (scale * jax.random.normal(ks[3], (1, 4 * hidden_size), jnp.float32)
                    + scale * jax.random.normal(ks[4], (1, 4 * hidden_size), jnp.float32)),
        "w_fc_t": scale * jax.random.normal(ks[5], (hidden_size, vocab_size), jnp.float32),
        "b_fc": scale * jax.random.normal(ks[6], (1, vocab_size), jnp.float32),
    }


if __name__ == "__main__":
    batch, seq_len = 2, 8
    embed_size, hidden_size, vocab_size = 32, 64, 128

    key = jax.random.PRNGKey(0)
    k_feat, k_cap, k_par = jax.random.split(key, 3)

    features = jax.random.normal(k_feat, (batch, embed_size), jnp.float32)
    captions = jax.random.randint(k_cap, (batch, seq_len), 0, vocab_size, jnp.int32)
    params = init_params(k_par, embed_size, hidden_size, vocab_size)

    out = jax.block_until_ready(decoder_rnn_forward(features, captions, params))
    ref = jax.block_until_ready(_reference_forward(features, captions, params))

    assert out.shape == (batch, seq_len, vocab_size)
    # bf16-streamed operands with f32 accumulation vs a pure-f32 reference.
    max_err = float(jnp.max(jnp.abs(out - ref)))
    assert jnp.allclose(out, ref, atol=5e-2, rtol=5e-2), max_err

    print("KERNEL_OK")
</pallas_src>

<mosaic_0001>
module attributes {stable_mosaic.version = 11 : i64} {
  func.func @_matmul_bias_kernel(%arg0: i32, %arg1: i32, %arg2: i32, %arg3: memref<256x128xbf16, #tpu.memory_space<vmem>>, %arg4: memref<128x512xbf16, #tpu.memory_space<vmem>>, %arg5: memref<1x512xf32, #tpu.memory_space<vmem>>, %arg6: memref<256x512xbf16, #tpu.memory_space<vmem>>, %arg7: memref<256x512xf32, #tpu.memory_space<vmem>>) attributes {dimension_semantics = [#tpu.dimension_semantics<parallel>, #tpu.dimension_semantics<parallel>, #tpu.dimension_semantics<arbitrary>], iteration_bounds = array<i64: 1, 1, 1>, scalar_prefetch = 0 : i64, scratch_operands = 1 : i64, tpu.core_type = #tpu.core_type<tc>, window_params = [{transform_indices = @transform_0, window_bounds = array<i64: 256, 128>}, {transform_indices = @transform_1, window_bounds = array<i64: 128, 512>}, {transform_indices = @transform_2, window_bounds = array<i64: 1, 512>}, {transform_indices = @transform_3, window_bounds = array<i64: 256, 512>}]} {
    %c0_i32 = arith.constant 0 : i32
    %0 = arith.cmpi eq, %arg2, %c0_i32 : i32
    %1 = arith.extui %0 : i1 to i32
    %c0_i32_0 = arith.constant 0 : i32
    %2 = arith.cmpi ne, %1, %c0_i32_0 : i32
    scf.if %2 {
      %cst_10 = arith.constant 0.000000e+00 : f32
      %12 = vector.broadcast %cst_10 : f32 to vector<256x512xf32>
      %c0_11 = arith.constant 0 : index
      %c0_12 = arith.constant 0 : index
      %13 = vector.load %arg7[%c0_11, %c0_12] : memref<256x512xf32, #tpu.memory_space<vmem>>, vector<256x512xf32>
      tpu.vector_store %arg7[%c0_11, %c0_12], %12 {strides = array<i32>} : memref<256x512xf32, #tpu.memory_space<vmem>>, vector<256x512xf32>,
    } else {
    }
    %c0 = arith.constant 0 : index
    %c0_1 = arith.constant 0 : index
    %3 = vector.load %arg7[%c0, %c0_1] : memref<256x512xf32, #tpu.memory_space<vmem>>, vector<256x512xf32>
    %c0_2 = arith.constant 0 : index
    %c0_3 = arith.constant 0 : index
    %4 = vector.load %arg3[%c0_2, %c0_3] : memref<256x128xbf16, #tpu.memory_space<vmem>>, vector<256x128xbf16>
    %c0_4 = arith.constant 0 : index
    %c0_5 = arith.constant 0 : index
    %5 = vector.load %arg4[%c0_4, %c0_5] : memref<128x512xbf16, #tpu.memory_space<vmem>>, vector<128x512xbf16>
    %cst = arith.constant dense<0.000000e+00> : vector<256x512xf32>
    %6 = tpu.matmul %4, %5, %cst {dimension_numbers = #tpu.dot_dimension_numbers<[1], [0], [0], [1], [0, 0, 1, 1], [], []>} : vector<256x128xbf16>, vector<128x512xbf16>, vector<256x512xf32> -> vector<256x512xf32>
    %7 = arith.addf %3, %6 : vector<256x512xf32>
    %c0_6 = arith.constant 0 : index
    %c0_7 = arith.constant 0 : index
    %8 = vector.load %arg7[%c0_6, %c0_7] : memref<256x512xf32, #tpu.memory_space<vmem>>, vector<256x512xf32>
    tpu.vector_store %arg7[%c0_6, %c0_7], %7 {strides = array<i32>} : memref<256x512xf32, #tpu.memory_space<vmem>>, vector<256x512xf32>,
    %c0_i32_8 = arith.constant 0 : i32
    %9 = arith.cmpi eq, %arg2, %c0_i32_8 : i32
    %10 = arith.extui %9 : i1 to i32
    %c0_i32_9 = arith.constant 0 : i32
    %11 = arith.cmpi ne, %10, %c0_i32_9 : i32
    scf.if %11 {
      %c0_10 = arith.constant 0 : index
      %c0_11 = arith.constant 0 : index
      %12 = vector.load %arg7[%c0_10, %c0_11] : memref<256x512xf32, #tpu.memory_space<vmem>>, vector<256x512xf32>
      %c0_12 = arith.constant 0 : index
      %c0_13 = arith.constant 0 : index
      %13 = vector.load %arg5[%c0_12, %c0_13] : memref<1x512xf32, #tpu.memory_space<vmem>>, vector<1x512xf32>
      %14 = vector.broadcast %13 : vector<1x512xf32> to vector<256x512xf32>
      %15 = arith.addf %12, %14 : vector<256x512xf32>
      %16 = arith.truncf %15 : vector<256x512xf32> to vector<256x512xbf16>
      %c0_14 = arith.constant 0 : index
      %c0_15 = arith.constant 0 : index
      %17 = vector.load %arg6[%c0_14, %c0_15] : memref<256x512xbf16, #tpu.memory_space<vmem>>, vector<256x512xbf16>
      tpu.vector_store %arg6[%c0_14, %c0_15], %16 {strides = array<i32>} : memref<256x512xbf16, #tpu.memory_space<vmem>>, vector<256x512xbf16>,
    } else {
    }
    return
  }
  func.func @transform_0(%arg0: i32, %arg1: i32, %arg2: i32) -> (i32, i32) {
    %c0_i32 = arith.constant 0 : i32
    return %arg0, %arg2 : i32, i32
  }
  func.func @transform_1(%arg0: i32, %arg1: i32, %arg2: i32) -> (i32, i32) {
    %c0_i32 = arith.constant 0 : i32
    return %arg2, %arg1 : i32, i32
  }
  func.func @transform_2(%arg0: i32, %arg1: i32, %arg2: i32) -> (i32, i32) {
    %c0_i32 = arith.constant 0 : i32
    %c0_i32_0 = arith.constant 0 : i32
    return %c0_i32, %arg1 : i32, i32
  }
  func.func @transform_3(%arg0: i32, %arg1: i32, %arg2: i32) -> (i32, i32) {
    %c0_i32 = arith.constant 0 : i32
    return %arg0, %arg1 : i32, i32
  }
}

</mosaic_0001>

<llo_original>
// kernel: tpu_custom_call.1
$region0: #{tpu_custom_call.1}
  #allocation0 [shape = 'u32[]', space=smem, size = 0x4, offset = 0x4, fixed_abs, tag = 'smem constant byte address 0x4 - core index']
  #allocation1 [shape = 'u32[144,128]{1,0:T(1,128)}', space=vmem, size = 0x12000, scoped, tag = 'internal scratch']
  #allocation2 [shape = 'f32[256,512]{1,0:T(8,128)}', space=vmem, size = 0x80000, scoped, tag = 'scratch operand']
  %s0 = inlined_call_operand.hbm [shape: bf16[256,128], index: 0, kind: input, shape index: {}]
  %s1 = inlined_call_operand.hbm [shape: bf16[128,512], index: 1, kind: input, shape index: {}]
  %s2 = inlined_call_operand.vmem [shape: f32[1,512], index: 2, kind: input, shape index: {}]
  %s3 = inlined_call_operand.hbm [shape: bf16[256,512], index: 3, kind: output, shape index: {}]
  %s4 = sld [smem:[#allocation0]]
  $region38: #{tpu_custom_call.1} parent=0
    _
  %s6 = ssub.s32 1, %s4
  %s7 = scalar_select 0, %s6, %s4
  $region1: #{tpu_custom_call.1} parent=0
    #allocation3 [shape = 'u8[65536]{0}', space=vmem, size = 0x10000, scoped, tag = 'input window, operand 0, single buffered']
    #allocation4 [shape = 's32[1]{0}', space=sflag, size = 0x4, scoped, tag = 'scoped memory for tpu_custom_call.1']
    #allocation5 [shape = 's32[1]{0}', space=sflag, size = 0x4, scoped, tag = 'scoped memory for tpu_custom_call.1']
    #allocation6 [shape = 'u8[131072]{0}', space=vmem, size = 0x20000, scoped, tag = 'input window, operand 1, single buffered']
    #allocation7 [shape = 's32[1]{0}', space=sflag, size = 0x4, scoped, tag = 'scoped memory for tpu_custom_call.1']
    #allocation8 [shape = 'u8[262144]{0}', space=vmem, size = 0x40000, scoped, tag = 'output window, operand 0, single buffered']
    %8 = vsyncpa [#allocation4], 0
    %9 = vsyncpa [#allocation7], 0
    %10 = vsyncpa [#allocation5], 0
    // Predicated region
    $region2: #{tpu_custom_call.1} parent=1 // pred_check
      _
    $region3: #{tpu_custom_call.1} parent=1 // pred_check_branch
      %12 = sbr.rel (0) target = $region5
    $region4: #{tpu_custom_call.1} parent=1 // pred_region
      %s14 = ssub.s32 2048, 2048
      %15 = vsyncadd [#allocation4], %s14
      %s16 = sshll.u32 [#allocation3], 4
      %s17 = int_to_ptr.vmem [resolvable:$true] %s16
      %22 = dma.hbm_to_vmem [thread:$0]  %s0, 2048, %s17, [#allocation4], 64, 64, 4
    $region5: #{tpu_custom_call.1} parent=1 // pred_fallthru
      _
    // Predicated region
    $region6: #{tpu_custom_call.1} parent=1 // pred_check
      _
    $region7: #{tpu_custom_call.1} parent=1 // pred_check_branch
      %24 = sbr.rel (0) target = $region9
    $region8: #{tpu_custom_call.1} parent=1 // pred_region
      %s26 = ssub.s32 4096, 4096
      %27 = vsyncadd [#allocation7], %s26
      %s28 = sshll.u32 [#allocation6], 4
      %s29 = int_to_ptr.vmem [resolvable:$true] %s28
      %34 = dma.hbm_to_vmem [thread:$0]  %s1, 4096, %s29, [#allocation7], 256, 256, 16
    $region9: #{tpu_custom_call.1} parent=1 // pred_fallthru
      _
    // Predicated region
    $region10: #{tpu_custom_call.1} parent=1 // pred_check
      _
    $region11: #{tpu_custom_call.1} parent=1 // pred_check_branch
      %36 = sbr.rel (0) target = $region13
    $region12: #{tpu_custom_call.1} parent=1 // pred_region
      _
    $region13: #{tpu_custom_call.1} parent=1 // pred_fallthru
      _
    // Predicated region
    $region14: #{tpu_custom_call.1} parent=1 // pred_check
      _
    $region15: #{tpu_custom_call.1} parent=1 // pred_check_branch
      %38 = sbr.rel (0) target = $region17
    $region16: #{tpu_custom_call.1} parent=1 // pred_region
      %39 = dma.done [#allocation4], 2048
    $region17: #{tpu_custom_call.1} parent=1 // pred_fallthru
      _
    // Predicated region
    $region18: #{tpu_custom_call.1} parent=1 // pred_check
      _
    $region19: #{tpu_custom_call.1} parent=1 // pred_check_branch
      %41 = sbr.rel (0) target = $region21
    $region20: #{tpu_custom_call.1} parent=1 // pred_region
      %42 = dma.done [#allocation7], 4096
    $region21: #{tpu_custom_call.1} parent=1 // pred_fallthru
      _
    %p44 = scmp.eq.s32.totalorder 0, 0
    // Predicated region
    $region22: #{tpu_custom_call.1} parent=1 // pred_check
      %p45 = pneg %p44
    $region23: #{tpu_custom_call.1} parent=1 // pred_check_branch
      %47 = sbr.rel (%p45) target = $region25
    $region24: #{tpu_custom_call.1} parent=1 // pred_region
      %48 = vst [vmem:[#allocation2] sm:$0xff] 0.0
      %49 = vst [vmem:[#allocation2 + $0x8] sm:$0xff] 0.0
      %50 = vst [vmem:[#allocation2 + $0x10] sm:$0xff] 0.0
      %51 = vst [vmem:[#allocation2 + $0x18] sm:$0xff] 0.0
      %52 = vst [vmem:[#allocation2 + $0x20] sm:$0xff] 0.0
      %53 = vst [vmem:[#allocation2 + $0x28] sm:$0xff] 0.0
      %54 = vst [vmem:[#allocation2 + $0x30] sm:$0xff] 0.0
      %55 = vst [vmem:[#allocation2 + $0x38] sm:$0xff] 0.0
      %56 = vst [vmem:[#allocation2 + $0x40] sm:$0xff] 0.0
      %57 = vst [vmem:[#allocation2 + $0x48] sm:$0xff] 0.0
      %58 = vst [vmem:[#allocation2 + $0x50] sm:$0xff] 0.0
      %59 = vst [vmem:[#allocation2 + $0x58] sm:$0xff] 0.0
      %60 = vst [vmem:[#allocation2 + $0x60] sm:$0xff] 0.0
      %61 = vst [vmem:[#allocation2 + $0x68] sm:$0xff] 0.0
      %62 = vst [vmem:[#allocation2 + $0x70] sm:$0xff] 0.0
      %63 = vst [vmem:[#allocation2 + $0x78] sm:$0xff] 0.0
      %64 = vst [vmem:[#allocation2 + $0x80] sm:$0xff] 0.0
      %65 = vst [vmem:[#allocation2 + $0x88] sm:$0xff] 0.0
      %66 = vst [vmem:[#allocation2 + $0x90] sm:$0xff] 0.0
      %67 = vst [vmem:[#allocation2 + $0x98] sm:$0xff] 0.0
      %68 = vst [vmem:[#allocation2 + $0xa0] sm:$0xff] 0.0
      %69 = vst [vmem:[#allocation2 + $0xa8] sm:$0xff] 0.0
      %70 = vst [vmem:[#allocation2 + $0xb0] sm:$0xff] 0.0
      %71 = vst [vmem:[#allocation2 + $0xb8] sm:$0xff] 0.0
      %72 = vst [vmem:[#allocation2 + $0xc0] sm:$0xff] 0.0
      %73 = vst [vmem:[#allocation2 + $0xc8] sm:$0xff] 0.0
      %74 = vst [vmem:[#allocation2 + $0xd0] sm:$0xff] 0.0
      %75 = vst [vmem:[#allocation2 + $0xd8] sm:$0xff] 0.0
      %76 = vst [vmem:[#allocation2 + $0xe0] sm:$0xff] 0.0
      %77 = vst [vmem:[#allocation2 + $0xe8] sm:$0xff] 0.0
      %78 = vst [vmem:[#allocation2 + $0xf0] sm:$0xff] 0.0
      %79 = vst [vmem:[#allocation2 + $0xf8] sm:$0xff] 0.0
      %80 = vst [vmem:[#allocation2 + $0x100] sm:$0xff] 0.0
      %81 = vst [vmem:[#allocation2 + $0x108] sm:$0xff] 0.0
      %82 = vst [vmem:[#allocation2 + $0x110] sm:$0xff] 0.0
      %83 = vst [vmem:[#allocation2 + $0x118] sm:$0xff] 0.0
      %84 = vst [vmem:[#allocation2 + $0x120] sm:$0xff] 0.0
      %85 = vst [vmem:[#allocation2 + $0x128] sm:$0xff] 0.0
      %86 = vst [vmem:[#allocation2 + $0x130] sm:$0xff] 0.0
      %87 = vst [vmem:[#allocation2 + $0x138] sm:$0xff] 0.0
      %88 = vst [vmem:[#allocation2 + $0x140] sm:$0xff] 0.0
      %89 = vst [vmem:[#allocation2 + $0x148] sm:$0xff] 0.0
      %90 = vst [vmem:[#allocation2 + $0x150] sm:$0xff] 0.0
      %91 = vst [vmem:[#allocation2 + $0x158] sm:$0xff] 0.0
      %92 = vst [vmem:[#allocation2 + $0x160] sm:$0xff] 0.0
      %93 = vst [vmem:[#allocation2 + $0x168] sm:$0xff] 0.0
      %94 = vst [vmem:[#allocation2 + $0x170] sm:$0xff] 0.0
      %95 = vst [vmem:[#allocation2 + $0x178] sm:$0xff] 0.0
      %96 = vst [vmem:[#allocation2 + $0x180] sm:$0xff] 0.0
      %97 = vst [vmem:[#allocation2 + $0x188] sm:$0xff] 0.0
      %98 = vst [vmem:[#allocation2 + $0x190] sm:$0xff] 0.0
      %99 = vst [vmem:[#allocation2 + $0x198] sm:$0xff] 0.0
      %100 = vst [vmem:[#allocation2 + $0x1a0] sm:$0xff] 0.0
      %101 = vst [vmem:[#allocation2 + $0x1a8] sm:$0xff] 0.0
      %102 = vst [vmem:[#allocation2 + $0x1b0] sm:$0xff] 0.0
      %103 = vst [vmem:[#allocation2 + $0x1b8] sm:$0xff] 0.0
      %104 = vst [vmem:[#allocation2 + $0x1c0] sm:$0xff] 0.0
      %105 = vst [vmem:[#allocation2 + $0x1c8] sm:$0xff] 0.0
      %106 = vst [vmem:[#allocation2 + $0x1d0] sm:$0xff] 0.0
      %107 = vst [vmem:[#allocation2 + $0x1d8] sm:$0xff] 0.0
      %108 = vst [vmem:[#allocation2 + $0x1e0] sm:$0xff] 0.0
      %109 = vst [vmem:[#allocation2 + $0x1e8] sm:$0xff] 0.0
      %110 = vst [vmem:[#allocation2 + $0x1f0] sm:$0xff] 0.0
      %111 = vst [vmem:[#allocation2 + $0x1f8] sm:$0xff] 0.0
      %112 = vst [vmem:[#allocation2 + $0x200] sm:$0xff] 0.0
      %113 = vst [vmem:[#allocation2 + $0x208] sm:$0xff] 0.0
      %114 = vst [vmem:[#allocation2 + $0x210] sm:$0xff] 0.0
      %115 = vst [vmem:[#allocation2 + $0x218] sm:$0xff] 0.0
      %116 = vst [vmem:[#allocation2 + $0x220] sm:$0xff] 0.0
      %117 = vst [vmem:[#allocation2 + $0x228] sm:$0xff] 0.0
      %118 = vst [vmem:[#allocation2 + $0x230] sm:$0xff] 0.0
      %119 = vst [vmem:[#allocation2 + $0x238] sm:$0xff] 0.0
      %120 = vst [vmem:[#allocation2 + $0x240] sm:$0xff] 0.0
      %121 = vst [vmem:[#allocation2 + $0x248] sm:$0xff] 0.0
      %122 = vst [vmem:[#allocation2 + $0x250] sm:$0xff] 0.0
      %123 = vst [vmem:[#allocation2 + $0x258] sm:$0xff] 0.0
      %124 = vst [vmem:[#allocation2 + $0x260] sm:$0xff] 0.0
      %125 = vst [vmem:[#allocation2 + $0x268] sm:$0xff] 0.0
      %126 = vst [vmem:[#allocation2 + $0x270] sm:$0xff] 0.0
      %127 = vst [vmem:[#allocation2 + $0x278] sm:$0xff] 0.0
      %128 = vst [vmem:[#allocation2 + $0x280] sm:$0xff] 0.0
      %129 = vst [vmem:[#allocation2 + $0x288] sm:$0xff] 0.0
      %130 = vst [vmem:[#allocation2 + $0x290] sm:$0xff] 0.0
      %131 = vst [vmem:[#allocation2 + $0x298] sm:$0xff] 0.0
      %132 = vst [vmem:[#allocation2 + $0x2a0] sm:$0xff] 0.0
      %133 = vst [vmem:[#allocation2 + $0x2a8] sm:$0xff] 0.0
      %134 = vst [vmem:[#allocation2 + $0x2b0] sm:$0xff] 0.0
      %135 = vst [vmem:[#allocation2 + $0x2b8] sm:$0xff] 0.0
      %136 = vst [vmem:[#allocation2 + $0x2c0] sm:$0xff] 0.0
      %137 = vst [vmem:[#allocation2 + $0x2c8] sm:$0xff] 0.0
      %138 = vst [vmem:[#allocation2 + $0x2d0] sm:$0xff] 0.0
      %139 = vst [vmem:[#allocation2 + $0x2d8] sm:$0xff] 0.0
      %140 = vst [vmem:[#allocation2 + $0x2e0] sm:$0xff] 0.0
      %141 = vst [vmem:[#allocation2 + $0x2e8] sm:$0xff] 0.0
      %142 = vst [vmem:[#allocation2 + $0x2f0] sm:$0xff] 0.0
      %143 = vst [vmem:[#allocation2 + $0x2f8] sm:$0xff] 0.0
      %144 = vst [vmem:[#allocation2 + $0x300] sm:$0xff] 0.0
      %145 = vst [vmem:[#allocation2 + $0x308] sm:$0xff] 0.0
      %146 = vst [vmem:[#allocation2 + $0x310] sm:$0xff] 0.0
      %147 = vst [vmem:[#allocation2 + $0x318] sm:$0xff] 0.0
      %148 = vst [vmem:[#allocation2 + $0x320] sm:$0xff] 0.0
      %149 = vst [vmem:[#allocation2 + $0x328] sm:$0xff] 0.0
      %150 = vst [vmem:[#allocation2 + $0x330] sm:$0xff] 0.0
      %151 = vst [vmem:[#allocation2 + $0x338] sm:$0xff] 0.0
      %152 = vst [vmem:[#allocation2 + $0x340] sm:$0xff] 0.0
      %153 = vst [vmem:[#allocation2 + $0x348] sm:$0xff] 0.0
      %154 = vst [vmem:[#allocation2 + $0x350] sm:$0xff] 0.0
      %155 = vst [vmem:[#allocation2 + $0x358] sm:$0xff] 0.0
      %156 = vst [vmem:[#allocation2 + $0x360] sm:$0xff] 0.0
      %157 = vst [vmem:[#allocation2 + $0x368] sm:$0xff] 0.0
      %158 = vst [vmem:[#allocation2 + $0x370] sm:$0xff] 0.0
      %159 = vst [vmem:[#allocation2 + $0x378] sm:$0xff] 0.0
      %160 = vst [vmem:[#allocation2 + $0x380] sm:$0xff] 0.0
      %161 = vst [vmem:[#allocation2 + $0x388] sm:$0xff] 0.0
      %162 = vst [vmem:[#allocation2 + $0x390] sm:$0xff] 0.0
      %163 = vst [vmem:[#allocation2 + $0x398] sm:$0xff] 0.0
      %164 = vst [vmem:[#allocation2 + $0x3a0] sm:$0xff] 0.0
      %165 = vst [vmem:[#allocation2 + $0x3a8] sm:$0xff] 0.0
      %166 = vst [vmem:[#allocation2 + $0x3b0] sm:$0xff] 0.0
      %167 = vst [vmem:[#allocation2 + $0x3b8] sm:$0xff] 0.0
      %168 = vst [vmem:[#allocation2 + $0x3c0] sm:$0xff] 0.0
      %169 = vst [vmem:[#allocation2 + $0x3c8] sm:$0xff] 0.0
      %170 = vst [vmem:[#allocation2 + $0x3d0] sm:$0xff] 0.0
      %171 = vst [vmem:[#allocation2 + $0x3d8] sm:$0xff] 0.0
      %172 = vst [vmem:[#allocation2 + $0x3e0] sm:$0xff] 0.0
      %173 = vst [vmem:[#allocation2 + $0x3e8] sm:$0xff] 0.0
      %174 = vst [vmem:[#allocation2 + $0x3f0] sm:$0xff] 0.0
      %175 = vst [vmem:[#allocation2 + $0x3f8] sm:$0xff] 0.0
    $region25: #{tpu_custom_call.1} parent=1 // pred_fallthru
      _
    %v176 = vld [vmem:[#allocation2] sm:$0xff]
    %v177 = vld [vmem:[#allocation2 + $0x8] sm:$0xff]
    %v178 = vld [vmem:[#allocation2 + $0x10] sm:$0xff]
    %v179 = vld [vmem:[#allocation2 + $0x18] sm:$0xff]
    %v180 = vld [vmem:[#allocation2 + $0x20] sm:$0xff]
    %v181 = vld [vmem:[#allocation2 + $0x28] sm:$0xff]
    %v182 = vld [vmem:[#allocation2 + $0x30] sm:$0xff]
    %v183 = vld [vmem:[#allocation2 + $0x38] sm:$0xff]
    %v184 = vld [vmem:[#allocation2 + $0x40] sm:$0xff]
    %v185 = vld [vmem:[#allocation2 + $0x48] sm:$0xff]
    %v186 = vld [vmem:[#allocation2 + $0x50] sm:$0xff]
    %v187 = vld [vmem:[#allocation2 + $0x58] sm:$0xff]
    %v188 = vld [vmem:[#allocation2 + $0x60] sm:$0xff]
    %v189 = vld [vmem:[#allocation2 + $0x68] sm:$0xff]
    %v190 = vld [vmem:[#allocation2 + $0x70] sm:$0xff]
    %v191 = vld [vmem:[#allocation2 + $0x78] sm:$0xff]
    %v192 = vld [vmem:[#allocation2 + $0x80] sm:$0xff]
    %v193 = vld [vmem:[#allocation2 + $0x88] sm:$0xff]
    %v194 = vld [vmem:[#allocation2 + $0x90] sm:$0xff]
    %v195 = vld [vmem:[#allocation2 + $0x98] sm:$0xff]
    %v196 = vld [vmem:[#allocation2 + $0xa0] sm:$0xff]
    %v197 = vld [vmem:[#allocation2 + $0xa8] sm:$0xff]
    %v198 = vld [vmem:[#allocation2 + $0xb0] sm:$0xff]
    %v199 = vld [vmem:[#allocation2 + $0xb8] sm:$0xff]
    %v200 = vld [vmem:[#allocation2 + $0xc0] sm:$0xff]
    %v201 = vld [vmem:[#allocation2 + $0xc8] sm:$0xff]
    %v202 = vld [vmem:[#allocation2 + $0xd0] sm:$0xff]
    %v203 = vld [vmem:[#allocation2 + $0xd8] sm:$0xff]
    %v204 = vld [vmem:[#allocation2 + $0xe0] sm:$0xff]
    %v205 = vld [vmem:[#allocation2 + $0xe8] sm:$0xff]
    %v206 = vld [vmem:[#allocation2 + $0xf0] sm:$0xff]
    %v207 = vld [vmem:[#allocation2 + $0xf8] sm:$0xff]
    %v208 = vld [vmem:[#allocation2 + $0x100] sm:$0xff]
    %v209 = vld [vmem:[#allocation2 + $0x108] sm:$0xff]
    %v210 = vld [vmem:[#allocation2 + $0x110] sm:$0xff]
    %v211 = vld [vmem:[#allocation2 + $0x118] sm:$0xff]
    %v212 = vld [vmem:[#allocation2 + $0x120] sm:$0xff]
    %v213 = vld [vmem:[#allocation2 + $0x128] sm:$0xff]
    %v214 = vld [vmem:[#allocation2 + $0x130] sm:$0xff]
    %v215 = vld [vmem:[#allocation2 + $0x138] sm:$0xff]
    %v216 = vld [vmem:[#allocation2 + $0x140] sm:$0xff]
    %v217 = vld [vmem:[#allocation2 + $0x148] sm:$0xff]
    %v218 = vld [vmem:[#allocation2 + $0x150] sm:$0xff]
    %v219 = vld [vmem:[#allocation2 + $0x158] sm:$0xff]
    %v220 = vld [vmem:[#allocation2 + $0x160] sm:$0xff]
    %v221 = vld [vmem:[#allocation2 + $0x168] sm:$0xff]
    %v222 = vld [vmem:[#allocation2 + $0x170] sm:$0xff]
    %v223 = vld [vmem:[#allocation2 + $0x178] sm:$0xff]
    %v224 = vld [vmem:[#allocation2 + $0x180] sm:$0xff]
    %v225 = vld [vmem:[#allocation2 + $0x188] sm:$0xff]
    %v226 = vld [vmem:[#allocation2 + $0x190] sm:$0xff]
    %v227 = vld [vmem:[#allocation2 + $0x198] sm:$0xff]
    %v228 = vld [vmem:[#allocation2 + $0x1a0] sm:$0xff]
    %v229 = vld [vmem:[#allocation2 + $0x1a8] sm:$0xff]
    %v230 = vld [vmem:[#allocation2 + $0x1b0] sm:$0xff]
    %v231 = vld [vmem:[#allocation2 + $0x1b8] sm:$0xff]
    %v232 = vld [vmem:[#allocation2 + $0x1c0] sm:$0xff]
    %v233 = vld [vmem:[#allocation2 + $0x1c8] sm:$0xff]
    %v234 = vld [vmem:[#allocation2 + $0x1d0] sm:$0xff]
    %v235 = vld [vmem:[#allocation2 + $0x1d8] sm:$0xff]
    %v236 = vld [vmem:[#allocation2 + $0x1e0] sm:$0xff]
    %v237 = vld [vmem:[#allocation2 + $0x1e8] sm:$0xff]
    %v238 = vld [vmem:[#allocation2 + $0x1f0] sm:$0xff]
    %v239 = vld [vmem:[#allocation2 + $0x1f8] sm:$0xff]
    %v240 = vld [vmem:[#allocation2 + $0x200] sm:$0xff]
    %v241 = vld [vmem:[#allocation2 + $0x208] sm:$0xff]
    %v242 = vld [vmem:[#allocation2 + $0x210] sm:$0xff]
    %v243 = vld [vmem:[#allocation2 + $0x218] sm:$0xff]
    %v244 = vld [vmem:[#allocation2 + $0x220] sm:$0xff]
    %v245 = vld [vmem:[#allocation2 + $0x228] sm:$0xff]
    %v246 = vld [vmem:[#allocation2 + $0x230] sm:$0xff]
    %v247 = vld [vmem:[#allocation2 + $0x238] sm:$0xff]
    %v248 = vld [vmem:[#allocation2 + $0x240] sm:$0xff]
    %v249 = vld [vmem:[#allocation2 + $0x248] sm:$0xff]
    %v250 = vld [vmem:[#allocation2 + $0x250] sm:$0xff]
    %v251 = vld [vmem:[#allocation2 + $0x258] sm:$0xff]
    %v252 = vld [vmem:[#allocation2 + $0x260] sm:$0xff]
    %v253 = vld [vmem:[#allocation2 + $0x268] sm:$0xff]
    %v254 = vld [vmem:[#allocation2 + $0x270] sm:$0xff]
    %v255 = vld [vmem:[#allocation2 + $0x278] sm:$0xff]
    %v256 = vld [vmem:[#allocation2 + $0x280] sm:$0xff]
    %v257 = vld [vmem:[#allocation2 + $0x288] sm:$0xff]
    %v258 = vld [vmem:[#allocation2 + $0x290] sm:$0xff]
    %v259 = vld [vmem:[#allocation2 + $0x298] sm:$0xff]
    %v260 = vld [vmem:[#allocation2 + $0x2a0] sm:$0xff]
    %v261 = vld [vmem:[#allocation2 + $0x2a8] sm:$0xff]
    %v262 = vld [vmem:[#allocation2 + $0x2b0] sm:$0xff]
    %v263 = vld [vmem:[#allocation2 + $0x2b8] sm:$0xff]
    %v264 = vld [vmem:[#allocation2 + $0x2c0] sm:$0xff]
    %v265 = vld [vmem:[#allocation2 + $0x2c8] sm:$0xff]
    %v266 = vld [vmem:[#allocation2 + $0x2d0] sm:$0xff]
    %v267 = vld [vmem:[#allocation2 + $0x2d8] sm:$0xff]
    %v268 = vld [vmem:[#allocation2 + $0x2e0] sm:$0xff]
    %v269 = vld [vmem:[#allocation2 + $0x2e8] sm:$0xff]
    %v270 = vld [vmem:[#allocation2 + $0x2f0] sm:$0xff]
    %v271 = vld [vmem:[#allocation2 + $0x2f8] sm:$0xff]
    %v272 = vld [vmem:[#allocation2 + $0x300] sm:$0xff]
    %v273 = vld [vmem:[#allocation2 + $0x308] sm:$0xff]
    %v274 = vld [vmem:[#allocation2 + $0x310] sm:$0xff]
    %v275 = vld [vmem:[#allocation2 + $0x318] sm:$0xff]
    %v276 = vld [vmem:[#allocation2 + $0x320] sm:$0xff]
    %v277 = vld [vmem:[#allocation2 + $0x328] sm:$0xff]
    %v278 = vld [vmem:[#allocation2 + $0x330] sm:$0xff]
    %v279 = vld [vmem:[#allocation2 + $0x338] sm:$0xff]
    %v280 = vld [vmem:[#allocation2 + $0x340] sm:$0xff]
    %v281 = vld [vmem:[#allocation2 + $0x348] sm:$0xff]
    %v282 = vld [vmem:[#allocation2 + $0x350] sm:$0xff]
    %v283 = vld [vmem:[#allocation2 + $0x358] sm:$0xff]
    %v284 = vld [vmem:[#allocation2 + $0x360] sm:$0xff]
    %v285 = vld [vmem:[#allocation2 + $0x368] sm:$0xff]
    %v286 = vld [vmem:[#allocation2 + $0x370] sm:$0xff]
    %v287 = vld [vmem:[#allocation2 + $0x378] sm:$0xff]
    %v288 = vld [vmem:[#allocation2 + $0x380] sm:$0xff]
    %v289 = vld [vmem:[#allocation2 + $0x388] sm:$0xff]
    %v290 = vld [vmem:[#allocation2 + $0x390] sm:$0xff]
    %v291 = vld [vmem:[#allocation2 + $0x398] sm:$0xff]
    %v292 = vld [vmem:[#allocation2 + $0x3a0] sm:$0xff]
    %v293 = vld [vmem:[#allocation2 + $0x3a8] sm:$0xff]
    %v294 = vld [vmem:[#allocation2 + $0x3b0] sm:$0xff]
    %v295 = vld [vmem:[#allocation2 + $0x3b8] sm:$0xff]
    %v296 = vld [vmem:[#allocation2 + $0x3c0] sm:$0xff]
    %v297 = vld [vmem:[#allocation2 + $0x3c8] sm:$0xff]
    %v298 = vld [vmem:[#allocation2 + $0x3d0] sm:$0xff]
    %v299 = vld [vmem:[#allocation2 + $0x3d8] sm:$0xff]
    %v300 = vld [vmem:[#allocation2 + $0x3e0] sm:$0xff]
    %v301 = vld [vmem:[#allocation2 + $0x3e8] sm:$0xff]
    %v302 = vld [vmem:[#allocation2 + $0x3f0] sm:$0xff]
    %v303 = vld [vmem:[#allocation2 + $0x3f8] sm:$0xff]
    %v304 = vld [vmem:[#allocation3] sm:$0xf]
    %v305 = vld [vmem:[#allocation3 + $0x4] sm:$0xf]
    %v306 = vld [vmem:[#allocation3 + $0x8] sm:$0xf]
    %v307 = vld [vmem:[#allocation3 + $0xc] sm:$0xf]
    %v308 = vld [vmem:[#allocation3 + $0x10] sm:$0xf]
    %v309 = vld [vmem:[#allocation3 + $0x14] sm:$0xf]
    %v310 = vld [vmem:[#allocation3 + $0x18] sm:$0xf]
    %v311 = vld [vmem:[#allocation3 + $0x1c] sm:$0xf]
    %v312 = vld [vmem:[#allocation3 + $0x20] sm:$0xf]
    %v313 = vld [vmem:[#allocation3 + $0x24] sm:$0xf]
    %v314 = vld [vmem:[#allocation3 + $0x28] sm:$0xf]
    %v315 = vld [vmem:[#allocation3 + $0x2c] sm:$0xf]
    %v316 = vld [vmem:[#allocation3 + $0x30] sm:$0xf]
    %v317 = vld [vmem:[#allocation3 + $0x34] sm:$0xf]
    %v318 = vld [vmem:[#allocation3 + $0x38] sm:$0xf]
    %v319 = vld [vmem:[#allocation3 + $0x3c] sm:$0xf]
    %v320 = vld [vmem:[#allocation3 + $0x40] sm:$0xf]
    %v321 = vld [vmem:[#allocation3 + $0x44] sm:$0xf]
    %v322 = vld [vmem:[#allocation3 + $0x48] sm:$0xf]
    %v323 = vld [vmem:[#allocation3 + $0x4c] sm:$0xf]
    %v324 = vld [vmem:[#allocation3 + $0x50] sm:$0xf]
    %v325 = vld [vmem:[#allocation3 + $0x54] sm:$0xf]
    %v326 = vld [vmem:[#allocation3 + $0x58] sm:$0xf]
    %v327 = vld [vmem:[#allocation3 + $0x5c] sm:$0xf]
    %v328 = vld [vmem:[#allocation3 + $0x60] sm:$0xf]
    %v329 = vld [vmem:[#allocation3 + $0x64] sm:$0xf]
    %v330 = vld [vmem:[#allocation3 + $0x68] sm:$0xf]
    %v331 = vld [vmem:[#allocation3 + $0x6c] sm:$0xf]
    %v332 = vld [vmem:[#allocation3 + $0x70] sm:$0xf]
    %v333 = vld [vmem:[#allocation3 + $0x74] sm:$0xf]
    %v334 = vld [vmem:[#allocation3 + $0x78] sm:$0xf]
    %v335 = vld [vmem:[#allocation3 + $0x7c] sm:$0xf]
    %v336 = vld [vmem:[#allocation6] sm:$0xff]
    %v337 = vld [vmem:[#allocation6 + $0x8] sm:$0xff]
    %v338 = vld [vmem:[#allocation6 + $0x10] sm:$0xff]
    %v339 = vld [vmem:[#allocation6 + $0x18] sm:$0xff]
    %v340 = vld [vmem:[#allocation6 + $0x20] sm:$0xff]
    %v341 = vld [vmem:[#allocation6 + $0x28] sm:$0xff]
    %v342 = vld [vmem:[#allocation6 + $0x30] sm:$0xff]
    %v343 = vld [vmem:[#allocation6 + $0x38] sm:$0xff]
    %v344 = vld [vmem:[#allocation6 + $0x40] sm:$0xff]
    %v345 = vld [vmem:[#allocation6 + $0x48] sm:$0xff]
    %v346 = vld [vmem:[#allocation6 + $0x50] sm:$0xff]
    %v347 = vld [vmem:[#allocation6 + $0x58] sm:$0xff]
    %v348 = vld [vmem:[#allocation6 + $0x60] sm:$0xff]
    %v349 = vld [vmem:[#allocation6 + $0x68] sm:$0xff]
    %v350 = vld [vmem:[#allocation6 + $0x70] sm:$0xff]
    %v351 = vld [vmem:[#allocation6 + $0x78] sm:$0xff]
    %v352 = vld [vmem:[#allocation6 + $0x80] sm:$0xff]
    %v353 = vld [vmem:[#allocation6 + $0x88] sm:$0xff]
    %v354 = vld [vmem:[#allocation6 + $0x90] sm:$0xff]
    %v355 = vld [vmem:[#allocation6 + $0x98] sm:$0xff]
    %v356 = vld [vmem:[#allocation6 + $0xa0] sm:$0xff]
    %v357 = vld [vmem:[#allocation6 + $0xa8] sm:$0xff]
    %v358 = vld [vmem:[#allocation6 + $0xb0] sm:$0xff]
    %v359 = vld [vmem:[#allocation6 + $0xb8] sm:$0xff]
    %v360 = vld [vmem:[#allocation6 + $0xc0] sm:$0xff]
    %v361 = vld [vmem:[#allocation6 + $0xc8] sm:$0xff]
    %v362 = vld [vmem:[#allocation6 + $0xd0] sm:$0xff]
    %v363 = vld [vmem:[#allocation6 + $0xd8] sm:$0xff]
    %v364 = vld [vmem:[#allocation6 + $0xe0] sm:$0xff]
    %v365 = vld [vmem:[#allocation6 + $0xe8] sm:$0xff]
    %v366 = vld [vmem:[#allocation6 + $0xf0] sm:$0xff]
    %v367 = vld [vmem:[#allocation6 + $0xf8] sm:$0xff]
    %v400 = vunpack.c.l.b16 %v304
    %v401 = vunpack.c.l.b16 %v305
    %v402 = vunpack.c.l.b16 %v306
    %v403 = vunpack.c.l.b16 %v307
    %v404 = vunpack.c.l.b16 %v308
    %v405 = vunpack.c.l.b16 %v309
    %v406 = vunpack.c.l.b16 %v310
    %v407 = vunpack.c.l.b16 %v311
    %v408 = vunpack.c.l.b16 %v312
    %v409 = vunpack.c.l.b16 %v313
    %v410 = vunpack.c.l.b16 %v314
    %v411 = vunpack.c.l.b16 %v315
    %v412 = vunpack.c.l.b16 %v316
    %v413 = vunpack.c.l.b16 %v317
    %v414 = vunpack.c.l.b16 %v318
    %v415 = vunpack.c.l.b16 %v319
    %v416 = vunpack.c.l.b16 %v320
    %v417 = vunpack.c.l.b16 %v321
    %v418 = vunpack.c.l.b16 %v322
    %v419 = vunpack.c.l.b16 %v323
    %v420 = vunpack.c.l.b16 %v324
    %v421 = vunpack.c.l.b16 %v325
    %v422 = vunpack.c.l.b16 %v326
    %v423 = vunpack.c.l.b16 %v327
    %v424 = vunpack.c.l.b16 %v328
    %v425 = vunpack.c.l.b16 %v329
    %v426 = vunpack.c.l.b16 %v330
    %v427 = vunpack.c.l.b16 %v331
    %v428 = vunpack.c.l.b16 %v332
    %v429 = vunpack.c.l.b16 %v333
    %v430 = vunpack.c.l.b16 %v334
    %v431 = vunpack.c.l.b16 %v335
    %v432 = vpack.c.b16 %v401, %v400
    %v433 = vpack.c.b16 %v403, %v402
    %v434 = vpack.c.b16 %v405, %v404
    %v435 = vpack.c.b16 %v407, %v406
    %v436 = vpack.c.b16 %v409, %v408
    %v437 = vpack.c.b16 %v411, %v410
    %v438 = vpack.c.b16 %v413, %v412
    %v439 = vpack.c.b16 %v415, %v414
    %v440 = vpack.c.b16 %v417, %v416
    %v441 = vpack.c.b16 %v419, %v418
    %v442 = vpack.c.b16 %v421, %v420
    %v443 = vpack.c.b16 %v423, %v422
    %v444 = vpack.c.b16 %v425, %v424
    %v445 = vpack.c.b16 %v427, %v426
    %v446 = vpack.c.b16 %v429, %v428
    %v447 = vpack.c.b16 %v431, %v430
    %v496 = vunpack.c.l.b16 %v336
    %v497 = vunpack.c.h.b16 %v336
    %v498 = vunpack.c.l.b16 %v337
    %v499 = vunpack.c.h.b16 %v337
    %v500 = vunpack.c.l.b16 %v338
    %v501 = vunpack.c.h.b16 %v338
    %v502 = vunpack.c.l.b16 %v339
    %v503 = vunpack.c.h.b16 %v339
    %v504 = vunpack.c.l.b16 %v340
    %v505 = vunpack.c.h.b16 %v340
    %v506 = vunpack.c.l.b16 %v341
    %v507 = vunpack.c.h.b16 %v341
    %v508 = vunpack.c.l.b16 %v342
    %v509 = vunpack.c.h.b16 %v342
    %v510 = vunpack.c.l.b16 %v343
    %v511 = vunpack.c.h.b16 %v343
    %v512 = vunpack.c.l.b16 %v344
    %v513 = vunpack.c.h.b16 %v344
    %v514 = vunpack.c.l.b16 %v345
    %v515 = vunpack.c.h.b16 %v345
    %v516 = vunpack.c.l.b16 %v346
    %v517 = vunpack.c.h.b16 %v346
    %v518 = vunpack.c.l.b16 %v347
    %v519 = vunpack.c.h.b16 %v347
    %v520 = vunpack.c.l.b16 %v348
    %v521 = vunpack.c.h.b16 %v348
    %v522 = vunpack.c.l.b16 %v349
    %v523 = vunpack.c.h.b16 %v349
    %v524 = vunpack.c.l.b16 %v350
    %v525 = vunpack.c.h.b16 %v350
    %v526 = vunpack.c.l.b16 %v351
    %v527 = vunpack.c.h.b16 %v351
    %v528 = vunpack.c.l.b16 %v352
    %v529 = vunpack.c.h.b16 %v352
    %v530 = vunpack.c.l.b16 %v353
    %v531 = vunpack.c.h.b16 %v353
    %v532 = vunpack.c.l.b16 %v354
    %v533 = vunpack.c.h.b16 %v354
    %v534 = vunpack.c.l.b16 %v355
    %v535 = vunpack.c.h.b16 %v355
    %v536 = vunpack.c.l.b16 %v356
    %v537 = vunpack.c.h.b16 %v356
    %v538 = vunpack.c.l.b16 %v357
    %v539 = vunpack.c.h.b16 %v357
    %v540 = vunpack.c.l.b16 %v358
    %v541 = vunpack.c.h.b16 %v358
    %v542 = vunpack.c.l.b16 %v359
    %v543 = vunpack.c.h.b16 %v359
    %v544 = vunpack.c.l.b16 %v360
    %v545 = vunpack.c.h.b16 %v360
    %v546 = vunpack.c.l.b16 %v361
    %v547 = vunpack.c.h.b16 %v361
    %v548 = vunpack.c.l.b16 %v362
    %v549 = vunpack.c.h.b16 %v362
    %v550 = vunpack.c.l.b16 %v363
    %v551 = vunpack.c.h.b16 %v363
    %v552 = vunpack.c.l.b16 %v364
    %v553 = vunpack.c.h.b16 %v364
    %v554 = vunpack.c.l.b16 %v365
    %v555 = vunpack.c.h.b16 %v365
    %v556 = vunpack.c.l.b16 %v366
    %v557 = vunpack.c.h.b16 %v366
    %v558 = vunpack.c.l.b16 %v367
    %v559 = vunpack.c.h.b16 %v367
    %v560 = vpack.c.b16 %v500, %v496
    %v561 = vpack.c.b16 %v501, %v497
    %v562 = vpack.c.b16 %v502, %v498
    %v563 = vpack.c.b16 %v503, %v499
    %v564 = vpack.c.b16 %v508, %v504
    %v565 = vpack.c.b16 %v509, %v505
    %v566 = vpack.c.b16 %v510, %v506
    %v567 = vpack.c.b16 %v511, %v507
    %v568 = vpack.c.b16 %v516, %v512
    %v569 = vpack.c.b16 %v517, %v513
    %v570 = vpack.c.b16 %v518, %v514
    %v571 = vpack.c.b16 %v519, %v515
    %v572 = vpack.c.b16 %v524, %v520
    %v573 = vpack.c.b16 %v525, %v521
    %v574 = vpack.c.b16 %v526, %v522
    %v575 = vpack.c.b16 %v527, %v523
    %v576 = vpack.c.b16 %v532, %v528
    %v577 = vpack.c.b16 %v533, %v529
    %v578 = vpack.c.b16 %v534, %v530
    %v579 = vpack.c.b16 %v535, %v531
    %v580 = vpack.c.b16 %v540, %v536
    %v581 = vpack.c.b16 %v541, %v537
    %v582 = vpack.c.b16 %v542, %v538
    %v583 = vpack.c.b16 %v543, %v539
    %v584 = vpack.c.b16 %v548, %v544
    %v585 = vpack.c.b16 %v549, %v545
    %v586 = vpack.c.b16 %v550, %v546
    %v587 = vpack.c.b16 %v551, %v547
    %v588 = vpack.c.b16 %v556, %v552
    %v589 = vpack.c.b16 %v557, %v553
    %v590 = vpack.c.b16 %v558, %v554
    %v591 = vpack.c.b16 %v559, %v555
    %624 = vmatprep.subr.bf16.mxu0 %v561
    %625 = vmatpush1.bf16.msra.mxu0 %v560
    %626 = vmatprep.subr.bf16.mxu0 %v565
    %627 = vmatpush1.bf16.msra.mxu0 %v564
    %628 = vmatprep.subr.bf16.mxu0 %v569
    %629 = vmatpush1.bf16.msra.mxu0 %v568
    %630 = vmatprep.subr.bf16.mxu0 %v573
    %631 = vmatpush1.bf16.msra.mxu0 %v572
    %632 = vmatprep.subr.bf16.mxu0 %v577
    %633 = vmatpush1.bf16.msra.mxu0 %v576
    %634 = vmatprep.subr.bf16.mxu0 %v581
    %635 = vmatpush1.bf16.msra.mxu0 %v580
    %636 = vmatprep.subr.bf16.mxu0 %v585
    %637 = vmatpush1.bf16.msra.mxu0 %v584
    %638 = vmatprep.subr.bf16.mxu0 %v589
    %639 = vmatpush1.bf16.msra.mxu0 %v588
    %640 = vmatprep.subr.bf16.mxu0 0
    %641 = vmatpush1.bf16.msra.mxu0 0
    %642 = vmatprep.subr.bf16.mxu0 0
    %643 = vmatpush1.bf16.msra.mxu0 0
    %644 = vmatprep.subr.bf16.mxu0 0
    %645 = vmatpush1.bf16.msra.mxu0 0
    %646 = vmatprep.subr.bf16.mxu0 0
    %647 = vmatpush1.bf16.msra.mxu0 0
    %648 = vmatprep.subr.bf16.mxu0 0
    %649 = vmatpush1.bf16.msra.mxu0 0
    %650 = vmatprep.subr.bf16.mxu0 0
    %651 = vmatpush1.bf16.msra.mxu0 0
    %652 = vmatprep.subr.bf16.mxu0 0
    %653 = vmatpush1.bf16.msra.mxu0 0
    %654 = vmatprep.subr.bf16.mxu0 0
    %655 = vmatpush1.bf16.msra.mxu0 0
    %656 = vmatprep.mubr.bf16.mxu0 0
    %657 = vmatmul.mubr.bf16.gmra.mrb[0].mxu0 %v432
    %v658 = vpop.f32.mrb[0].mxu0
    %v659 = vadd.f32 0.0, %v658
    %v660 = vpop.f32.mrb[0].mxu0
    %v661 = vadd.f32 0.0, %v660
    %v662 = vpop.f32.mrb[0].mxu0
    %v663 = vadd.f32 0.0, %v662
    %v664 = vpop.f32.mrb[0].mxu0
    %v665 = vadd.f32 0.0, %v664
    %666 = vmatprep.mubr.bf16.mxu0 0
    %667 = vmatmul.mubr.bf16.gmra.mrb[0].mxu0 %v433
    %v668 = vpop.f32.mrb[0].mxu0
    %v669 = vadd.f32 0.0, %v668
    %v670 = vpop.f32.mrb[0].mxu0
    %v671 = vadd.f32 0.0, %v670
    %v672 = vpop.f32.mrb[0].mxu0
    %v673 = vadd.f32 0.0, %v672
    %v674 = vpop.f32.mrb[0].mxu0
    %v675 = vadd.f32 0.0, %v674
    %676 = vmatprep.mubr.bf16.mxu0 0
    %677 = vmatmul.mubr.bf16.gmra.mrb[0].mxu0 %v434
    %v678 = vpop.f32.mrb[0].mxu0
    %v679 = vadd.f32 0.0, %v678
    %v680 = vpop.f32.mrb[0].mxu0
    %v681 = vadd.f32 0.0, %v680
    %v682 = vpop.f32.mrb[0].mxu0
    %v683 = vadd.f32 0.0, %v682
    %v684 = vpop.f32.mrb[0].mxu0
    %v685 = vadd.f32 0.0, %v684
    %686 = vmatprep.mubr.bf16.mxu0 0
    %687 = vmatmul.mubr.bf16.gmra.mrb[0].mxu0 %v435
    %v688 = vpop.f32.mrb[0].mxu0
    %v689 = vadd.f32 0.0, %v688
    %v690 = vpop.f32.mrb[0].mxu0
    %v691 = vadd.f32 0.0, %v690
    %v692 = vpop.f32.mrb[0].mxu0
    %v693 = vadd.f32 0.0, %v692
    %v694 = vpop.f32.mrb[0].mxu0
    %v695 = vadd.f32 0.0, %v694
    %696 = vmatprep.mubr.bf16.mxu0 0
    %697 = vmatmul.mubr.bf16.gmra.mrb[0].mxu0 %v436
    %v698 = vpop.f32.mrb[0].mxu0
    %v699 = vadd.f32 0.0, %v698
    %v700 = vpop.f32.mrb[0].mxu0
    %v701 = vadd.f32 0.0, %v700
    %v702 = vpop.f32.mrb[0].mxu0
    %v703 = vadd.f32 0.0, %v702
    %v704 = vpop.f32.mrb[0].mxu0
    %v705 = vadd.f32 0.0, %v704
    %706 = vmatprep.mubr.bf16.mxu0 0
    %707 = vmatmul.mubr.bf16.gmra.mrb[0].mxu0 %v437
    %v708 = vpop.f32.mrb[0].mxu0
    %v709 = vadd.f32 0.0, %v708
    %v710 = vpop.f32.mrb[0].mxu0
    %v711 = vadd.f32 0.0, %v710
    %v712 = vpop.f32.mrb[0].mxu0
    %v713 = vadd.f32 0.0, %v712
    %v714 = vpop.f32.mrb[0].mxu0
    %v715 = vadd.f32 0.0, %v714
    %716 = vmatprep.mubr.bf16.mxu0 0
    %717 = vmatmul.mubr.bf16.gmra.mrb[0].mxu0 %v438
    %v718 = vpop.f32.mrb[0].mxu0
    %v719 = vadd.f32 0.0, %v718
    %v720 = vpop.f32.mrb[0].mxu0
    %v721 = vadd.f32 0.0, %v720
    %v722 = vpop.f32.mrb[0].mxu0
    %v723 = vadd.f32 0.0, %v722
    %v724 = vpop.f32.mrb[0].mxu0
    %v725 = vadd.f32 0.0, %v724
    %726 = vmatprep.mubr.bf16.mxu0 0
    %727 = vmatmul.mubr.bf16.gmra.mrb[0].mxu0 %v439
    %v728 = vpop.f32.mrb[0].mxu0
    %v729 = vadd.f32 0.0, %v728
    %v730 = vpop.f32.mrb[0].mxu0
    %v731 = vadd.f32 0.0, %v730
    %v732 = vpop.f32.mrb[0].mxu0
    %v733 = vadd.f32 0.0, %v732
    %v734 = vpop.f32.mrb[0].mxu0
    %v735 = vadd.f32 0.0, %v734
    %736 = vmatprep.mubr.bf16.mxu0 0
    %737 = vmatmul.mubr.bf16.gmra.mrb[0].mxu0 %v440
    %v738 = vpop.f32.mrb[0].mxu0
    %v739 = vadd.f32 0.0, %v738
    %v740 = vpop.f32.mrb[0].mxu0
    %v741 = vadd.f32 0.0, %v740
    %v742 = vpop.f32.mrb[0].mxu0
    %v743 = vadd.f32 0.0, %v742
    %v744 = vpop.f32.mrb[0].mxu0
    %v745 = vadd.f32 0.0, %v744
    %746 = vmatprep.mubr.bf16.mxu0 0
    %747 = vmatmul.mubr.bf16.gmra.mrb[0].mxu0 %v441
    %v748 = vpop.f32.mrb[0].mxu0
    %v749 = vadd.f32 0.0, %v748
    %v750 = vpop.f32.mrb[0].mxu0
    %v751 = vadd.f32 0.0, %v750
    %v752 = vpop.f32.mrb[0].mxu0
    %v753 = vadd.f32 0.0, %v752
    %v754 = vpop.f32.mrb[0].mxu0
    %v755 = vadd.f32 0.0, %v754
    %756 = vmatprep.mubr.bf16.mxu0 0
    %757 = vmatmul.mubr.bf16.gmra.mrb[0].mxu0 %v442
    %v758 = vpop.f32.mrb[0].mxu0
    %v759 = vadd.f32 0.0, %v758
    %v760 = vpop.f32.mrb[0].mxu0
    %v761 = vadd.f32 0.0, %v760
    %v762 = vpop.f32.mrb[0].mxu0
    %v763 = vadd.f32 0.0, %v762
    %v764 = vpop.f32.mrb[0].mxu0
    %v765 = vadd.f32 0.0, %v764
    %766 = vmatprep.mubr.bf16.mxu0 0
    %767 = vmatmul.mubr.bf16.gmra.mrb[0].mxu0 %v443
    %v768 = vpop.f32.mrb[0].mxu0
    %v769 = vadd.f32 0.0, %v768
    %v770 = vpop.f32.mrb[0].mxu0
    %v771 = vadd.f32 0.0, %v770
    %v772 = vpop.f32.mrb[0].mxu0
    %v773 = vadd.f32 0.0, %v772
    %v774 = vpop.f32.mrb[0].mxu0
    %v775 = vadd.f32 0.0, %v774
    %776 = vmatprep.mubr.bf16.mxu0 0
    %777 = vmatmul.mubr.bf16.gmra.mrb[0].mxu0 %v444
    %v778 = vpop.f32.mrb[0].mxu0
    %v779 = vadd.f32 0.0, %v778
    %v780 = vpop.f32.mrb[0].mxu0
    %v781 = vadd.f32 0.0, %v780
    %v782 = vpop.f32.mrb[0].mxu0
    %v783 = vadd.f32 0.0, %v782
    %v784 = vpop.f32.mrb[0].mxu0
    %v785 = vadd.f32 0.0, %v784
    %786 = vmatprep.mubr.bf16.mxu0 0
    %787 = vmatmul.mubr.bf16.gmra.mrb[0].mxu0 %v445
    %v788 = vpop.f32.mrb[0].mxu0
    %v789 = vadd.f32 0.0, %v788
    %v790 = vpop.f32.mrb[0].mxu0
    %v791 = vadd.f32 0.0, %v790
    %v792 = vpop.f32.mrb[0].mxu0
    %v793 = vadd.f32 0.0, %v792
    %v794 = vpop.f32.mrb[0].mxu0
    %v795 = vadd.f32 0.0, %v794
    %796 = vmatprep.mubr.bf16.mxu0 0
    %797 = vmatmul.mubr.bf16.gmra.mrb[0].mxu0 %v446
    %v798 = vpop.f32.mrb[0].mxu0
    %v799 = vadd.f32 0.0, %v798
    %v800 = vpop.f32.mrb[0].mxu0
    %v801 = vadd.f32 0.0, %v800
    %v802 = vpop.f32.mrb[0].mxu0
    %v803 = vadd.f32 0.0, %v802
    %v804 = vpop.f32.mrb[0].mxu0
    %v805 = vadd.f32 0.0, %v804
    %806 = vmatprep.mubr.bf16.mxu0 0
    %807 = vmatmul.mubr.bf16.gmra.mrb[0].mxu0 %v447
    %v808 = vpop.f32.mrb[0].mxu0
    %v809 = vadd.f32 0.0, %v808
    %v810 = vpop.f32.mrb[0].mxu0
    %v811 = vadd.f32 0.0, %v810
    %v812 = vpop.f32.mrb[0].mxu0
    %v813 = vadd.f32 0.0, %v812
    %v814 = vpop.f32.mrb[0].mxu0
    %v815 = vadd.f32 0.0, %v814
    %816 = vdwg.mxu0
    %817 = vmatprep.subr.bf16.mxu0 %v563
    %818 = vmatpush1.bf16.msra.mxu0 %v562
    %819 = vmatprep.subr.bf16.mxu0 %v567
    %820 = vmatpush1.bf16.msra.mxu0 %v566
    %821 = vmatprep.subr.bf16.mxu0 %v571
    %822 = vmatpush1.bf16.msra.mxu0 %v570
    %823 = vmatprep.subr.bf16.mxu0 %v575
    %824 = vmatpush1.bf16.msra.mxu0 %v574
    %825 = vmatprep.subr.bf16.mxu0 %v579
    %826 = vmatpush1.bf16.msra.mxu0 %v578
    %827 = vmatprep.subr.bf16.mxu0 %v583
    %828 = vmatpush1.bf16.msra.mxu0 %v582
    %829 = vmatprep.subr.bf16.mxu0 %v587
    %830 = vmatpush1.bf16.msra.mxu0 %v586
    %831 = vmatprep.subr.bf16.mxu0 %v591
    %832 = vmatpush1.bf16.msra.mxu0 %v590
    %833 = vmatprep.subr.bf16.mxu0 0
    %834 = vmatpush1.bf16.msra.mxu0 0
    %835 = vmatprep.subr.bf16.mxu0 0
    %836 = vmatpush1.bf16.msra.mxu0 0
    %837 = vmatprep.subr.bf16.mxu0 0
    %838 = vmatpush1.bf16.msra.mxu0 0
    %839 = vmatprep.subr.bf16.mxu0 0
    %840 = vmatpush1.bf16.msra.mxu0 0
    %841 = vmatprep.subr.bf16.mxu0 0
    %842 = vmatpush1.bf16.msra.mxu0 0
    %843 = vmatprep.subr.bf16.mxu0 0
    %844 = vmatpush1.bf16.msra.mxu0 0
    %845 = vmatprep.subr.bf16.mxu0 0
    %846 = vmatpush1.bf16.msra.mxu0 0
    %847 = vmatprep.subr.bf16.mxu0 0
    %848 = vmatpush1.bf16.msra.mxu0 0
    %849 = vmatprep.mubr.bf16.mxu0 0
    %850 = vmatmul.mubr.bf16.gmra.mrb[0].mxu0 %v432
    %v851 = vpop.f32.mrb[0].mxu0
    %v852 = vadd.f32 0.0, %v851
    %v853 = vpop.f32.mrb[0].mxu0
    %v854 = vadd.f32 0.0, %v853
    %v855 = vpop.f32.mrb[0].mxu0
    %v856 = vadd.f32 0.0, %v855
    %v857 = vpop.f32.mrb[0].mxu0
    %v858 = vadd.f32 0.0, %v857
    %859 = vmatprep.mubr.bf16.mxu0 0
    %860 = vmatmul.mubr.bf16.gmra.mrb[0].mxu0 %v433
    %v861 = vpop.f32.mrb[0].mxu0
    %v862 = vadd.f32 0.0, %v861
    %v863 = vpop.f32.mrb[0].mxu0
    %v864 = vadd.f32 0.0, %v863
    %v865 = vpop.f32.mrb[0].mxu0
    %v866 = vadd.f32 0.0, %v865
    %v867 = vpop.f32.mrb[0].mxu0
    %v868 = vadd.f32 0.0, %v867
    %869 = vmatprep.mubr.bf16.mxu0 0
    %870 = vmatmul.mubr.bf16.gmra.mrb[0].mxu0 %v434
    %v871 = vpop.f32.mrb[0].mxu0
    %v872 = vadd.f32 0.0, %v871
    %v873 = vpop.f32.mrb[0].mxu0
    %v874 = vadd.f32 0.0, %v873
    %v875 = vpop.f32.mrb[0].mxu0
    %v876 = vadd.f32 0.0, %v875
    %v877 = vpop.f32.mrb[0].mxu0
    %v878 = vadd.f32 0.0, %v877
    %879 = vmatprep.mubr.bf16.mxu0 0
    %880 = vmatmul.mubr.bf16.gmra.mrb[0].mxu0 %v435
    %v881 = vpop.f32.mrb[0].mxu0
    %v882 = vadd.f32 0.0, %v881
    %v883 = vpop.f32.mrb[0].mxu0
    %v884 = vadd.f32 0.0, %v883
    %v885 = vpop.f32.mrb[0].mxu0
    %v886 = vadd.f32 0.0, %v885
    %v887 = vpop.f32.mrb[0].mxu0
    %v888 = vadd.f32 0.0, %v887
    %889 = vmatprep.mubr.bf16.mxu0 0
    %890 = vmatmul.mubr.bf16.gmra.mrb[0].mxu0 %v436
    %v891 = vpop.f32.mrb[0].mxu0
    %v892 = vadd.f32 0.0, %v891
    %v893 = vpop.f32.mrb[0].mxu0
    %v894 = vadd.f32 0.0, %v893
    %v895 = vpop.f32.mrb[0].mxu0
    %v896 = vadd.f32 0.0, %v895
    %v897 = vpop.f32.mrb[0].mxu0
    %v898 = vadd.f32 0.0, %v897
    %899 = vmatprep.mubr.bf16.mxu0 0
    %900 = vmatmul.mubr.bf16.gmra.mrb[0].mxu0 %v437
    %v901 = vpop.f32.mrb[0].mxu0
    %v902 = vadd.f32 0.0, %v901
    %v903 = vpop.f32.mrb[0].mxu0
    %v904 = vadd.f32 0.0, %v903
    %v905 = vpop.f32.mrb[0].mxu0
    %v906 = vadd.f32 0.0, %v905
    %v907 = vpop.f32.mrb[0].mxu0
    %v908 = vadd.f32 0.0, %v907
    %909 = vmatprep.mubr.bf16.mxu0 0
    %910 = vmatmul.mubr.bf16.gmra.mrb[0].mxu0 %v438
    %v911 = vpop.f32.mrb[0].mxu0
    %v912 = vadd.f32 0.0, %v911
    %v913 = vpop.f32.mrb[0].mxu0
    %v914 = vadd.f32 0.0, %v913
    %v915 = vpop.f32.mrb[0].mxu0
    %v916 = vadd.f32 0.0, %v915
    %v917 = vpop.f32.mrb[0].mxu0
    %v918 = vadd.f32 0.0, %v917
    %919 = vmatprep.mubr.bf16.mxu0 0
    %920 = vmatmul.mubr.bf16.gmra.mrb[0].mxu0 %v439
    %v921 = vpop.f32.mrb[0].mxu0
    %v922 = vadd.f32 0.0, %v921
    %v923 = vpop.f32.mrb[0].mxu0
    %v924 = vadd.f32 0.0, %v923
    %v925 = vpop.f32.mrb[0].mxu0
    %v926 = vadd.f32 0.0, %v925
    %v927 = vpop.f32.mrb[0].mxu0
    %v928 = vadd.f32 0.0, %v927
    %929 = vmatprep.mubr.bf16.mxu0 0
    %930 = vmatmul.mubr.bf16.gmra.mrb[0].mxu0 %v440
    %v931 = vpop.f32.mrb[0].mxu0
    %v932 = vadd.f32 0.0, %v931
    %v933 = vpop.f32.mrb[0].mxu0
    %v934 = vadd.f32 0.0, %v933
    %v935 = vpop.f32.mrb[0].mxu0
    %v936 = vadd.f32 0.0, %v935
    %v937 = vpop.f32.mrb[0].mxu0
    %v938 = vadd.f32 0.0, %v937
    %939 = vmatprep.mubr.bf16.mxu0 0
    %940 = vmatmul.mubr.bf16.gmra.mrb[0].mxu0 %v441
    %v941 = vpop.f32.mrb[0].mxu0
    %v942 = vadd.f32 0.0, %v941
    %v943 = vpop.f32.mrb[0].mxu0
    %v944 = vadd.f32 0.0, %v943
    %v945 = vpop.f32.mrb[0].mxu0
    %v946 = vadd.f32 0.0, %v945
    %v947 = vpop.f32.mrb[0].mxu0
    %v948 = vadd.f32 0.0, %v947
    %949 = vmatprep.mubr.bf16.mxu0 0
    %950 = vmatmul.mubr.bf16.gmra.mrb[0].mxu0 %v442
    %v951 = vpop.f32.mrb[0].mxu0
    %v952 = vadd.f32 0.0, %v951
    %v953 = vpop.f32.mrb[0].mxu0
    %v954 = vadd.f32 0.0, %v953
    %v955 = vpop.f32.mrb[0].mxu0
    %v956 = vadd.f32 0.0, %v955
    %v957 = vpop.f32.mrb[0].mxu0
    %v958 = vadd.f32 0.0, %v957
    %959 = vmatprep.mubr.bf16.mxu0 0
    %960 = vmatmul.mubr.bf16.gmra.mrb[0].mxu0 %v443
    %v961 = vpop.f32.mrb[0].mxu0
    %v962 = vadd.f32 0.0, %v961
    %v963 = vpop.f32.mrb[0].mxu0
    %v964 = vadd.f32 0.0, %v963
    %v965 = vpop.f32.mrb[0].mxu0
    %v966 = vadd.f32 0.0, %v965
    %v967 = vpop.f32.mrb[0].mxu0
    %v968 = vadd.f32 0.0, %v967
    %969 = vmatprep.mubr.bf16.mxu0 0
    %970 = vmatmul.mubr.bf16.gmra.mrb[0].mxu0 %v444
    %v971 = vpop.f32.mrb[0].mxu0
    %v972 = vadd.f32 0.0, %v971
    %v973 = vpop.f32.mrb[0].mxu0
    %v974 = vadd.f32 0.0, %v973
    %v975 = vpop.f32.mrb[0].mxu0
    %v976 = vadd.f32 0.0, %v975
    %v977 = vpop.f32.mrb[0].mxu0
    %v978 = vadd.f32 0.0, %v977
    %979 = vmatprep.mubr.bf16.mxu0 0
    %980 = vmatmul.mubr.bf16.gmra.mrb[0].mxu0 %v445
    %v981 = vpop.f32.mrb[0].mxu0
    %v982 = vadd.f32 0.0, %v981
    %v983 = vpop.f32.mrb[0].mxu0
    %v984 = vadd.f32 0.0, %v983
    %v985 = vpop.f32.mrb[0].mxu0
    %v986 = vadd.f32 0.0, %v985
    %v987 = vpop.f32.mrb[0].mxu0
    %v988 = vadd.f32 0.0, %v987
    %989 = vmatprep.mubr.bf16.mxu0 0
    %990 = vmatmul.mubr.bf16.gmra.mrb[0].mxu0 %v446
    %v991 = vpop.f32.mrb[0].mxu0
    %v992 = vadd.f32 0.0, %v991
    %v993 = vpop.f32.mrb[0].mxu0
    %v994 = vadd.f32 0.0, %v993
    %v995 = vpop.f32.mrb[0].mxu0
    %v996 = vadd.f32 0.0, %v995
    %v997 = vpop.f32.mrb[0].mxu0
    %v998 = vadd.f32 0.0, %v997
    %999 = vmatprep.mubr.bf16.mxu0 0
    %1000 = vmatmul.mubr.bf16.gmra.mrb[0].mxu0 %v447
    %v1001 = vpop.f32.mrb[0].mxu0
    %v1002 = vadd.f32 0.0, %v1001
    %v1003 = vpop.f32.mrb[0].mxu0
    %v1004 = vadd.f32 0.0, %v1003
    %v1005 = vpop.f32.mrb[0].mxu0
    %v1006 = vadd.f32 0.0, %v1005
    %v1007 = vpop.f32.mrb[0].mxu0
    %v1008 = vadd.f32 0.0, %v1007
    %1009 = vdwg.mxu0
    %v1010 = vadd.f32 %v176, %v659
    %v1011 = vadd.f32 %v177, %v661
    %v1012 = vadd.f32 %v178, %v852
    %v1013 = vadd.f32 %v179, %v854
    %v1014 = vadd.f32 %v180, %v663
    %v1015 = vadd.f32 %v181, %v665
    %v1016 = vadd.f32 %v182, %v856
    %v1017 = vadd.f32 %v183, %v858
    %v1018 = vadd.f32 %v184, %v669
    %v1019 = vadd.f32 %v185, %v671
    %v1020 = vadd.f32 %v186, %v862
    %v1021 = vadd.f32 %v187, %v864
    %v1022 = vadd.f32 %v188, %v673
    %v1023 = vadd.f32 %v189, %v675
    %v1024 = vadd.f32 %v190, %v866
    %v1025 = vadd.f32 %v191, %v868
    %v1026 = vadd.f32 %v192, %v679
    %v1027 = vadd.f32 %v193, %v681
    %v1028 = vadd.f32 %v194, %v872
    %v1029 = vadd.f32 %v195, %v874
    %v1030 = vadd.f32 %v196, %v683
    %v1031 = vadd.f32 %v197, %v685
    %v1032 = vadd.f32 %v198, %v876
    %v1033 = vadd.f32 %v199, %v878
    %v1034 = vadd.f32 %v200, %v689
    %v1035 = vadd.f32 %v201, %v691
    %v1036 = vadd.f32 %v202, %v882
    %v1037 = vadd.f32 %v203, %v884
    %v1038 = vadd.f32 %v204, %v693
    %v1039 = vadd.f32 %v205, %v695
    %v1040 = vadd.f32 %v206, %v886
    %v1041 = vadd.f32 %v207, %v888
    %v1042 = vadd.f32 %v208, %v699
    %v1043 = vadd.f32 %v209, %v701
    %v1044 = vadd.f32 %v210, %v892
    %v1045 = vadd.f32 %v211, %v894
    %v1046 = vadd.f32 %v212, %v703
    %v1047 = vadd.f32 %v213, %v705
    %v1048 = vadd.f32 %v214, %v896
    %v1049 = vadd.f32 %v215, %v898
    %v1050 = vadd.f32 %v216, %v709
    %v1051 = vadd.f32 %v217, %v711
    %v1052 = vadd.f32 %v218, %v902
    %v1053 = vadd.f32 %v219, %v904
    %v1054 = vadd.f32 %v220, %v713
    %v1055 = vadd.f32 %v221, %v715
    %v1056 = vadd.f32 %v222, %v906
    %v1057 = vadd.f32 %v223, %v908
    %v1058 = vadd.f32 %v224, %v719
    %v1059 = vadd.f32 %v225, %v721
    %v1060 = vadd.f32 %v226, %v912
    %v1061 = vadd.f32 %v227, %v914
    %v1062 = vadd.f32 %v228, %v723
    %v1063 = vadd.f32 %v229, %v725
    %v1064 = vadd.f32 %v230, %v916
    %v1065 = vadd.f32 %v231, %v918
    %v1066 = vadd.f32 %v232, %v729
    %v1067 = vadd.f32 %v233, %v731
    %v1068 = vadd.f32 %v234, %v922
    %v1069 = vadd.f32 %v235, %v924
    %v1070 = vadd.f32 %v236, %v733
    %v1071 = vadd.f32 %v237, %v735
    %v1072 = vadd.f32 %v238, %v926
    %v1073 = vadd.f32 %v239, %v928
    %v1074 = vadd.f32 %v240, %v739
    %v1075 = vadd.f32 %v241, %v741
    %v1076 = vadd.f32 %v242, %v932
    %v1077 = vadd.f32 %v243, %v934
    %v1078 = vadd.f32 %v244, %v743
    %v1079 = vadd.f32 %v245, %v745
    %v1080 = vadd.f32 %v246, %v936
    %v1081 = vadd.f32 %v247, %v938
    %v1082 = vadd.f32 %v248, %v749
    %v1083 = vadd.f32 %v249, %v751
    %v1084 = vadd.f32 %v250, %v942
    %v1085 = vadd.f32 %v251, %v944
    %v1086 = vadd.f32 %v252, %v753
    %v1087 = vadd.f32 %v253, %v755
    %v1088 = vadd.f32 %v254, %v946
    %v1089 = vadd.f32 %v255, %v948
    %v1090 = vadd.f32 %v256, %v759
    %v1091 = vadd.f32 %v257, %v761
    %v1092 = vadd.f32 %v258, %v952
    %v1093 = vadd.f32 %v259, %v954
    %v1094 = vadd.f32 %v260, %v763
    %v1095 = vadd.f32 %v261, %v765
    %v1096 = vadd.f32 %v262, %v956
    %v1097 = vadd.f32 %v263, %v958
    %v1098 = vadd.f32 %v264, %v769
    %v1099 = vadd.f32 %v265, %v771
    %v1100 = vadd.f32 %v266, %v962
    %v1101 = vadd.f32 %v267, %v964
    %v1102 = vadd.f32 %v268, %v773
    %v1103 = vadd.f32 %v269, %v775
    %v1104 = vadd.f32 %v270, %v966
    %v1105 = vadd.f32 %v271, %v968
    %v1106 = vadd.f32 %v272, %v779
    %v1107 = vadd.f32 %v273, %v781
    %v1108 = vadd.f32 %v274, %v972
    %v1109 = vadd.f32 %v275, %v974
    %v1110 = vadd.f32 %v276, %v783
    %v1111 = vadd.f32 %v277, %v785
    %v1112 = vadd.f32 %v278, %v976
    %v1113 = vadd.f32 %v279, %v978
    %v1114 = vadd.f32 %v280, %v789
    %v1115 = vadd.f32 %v281, %v791
    %v1116 = vadd.f32 %v282, %v982
    %v1117 = vadd.f32 %v283, %v984
    %v1118 = vadd.f32 %v284, %v793
    %v1119 = vadd.f32 %v285, %v795
    %v1120 = vadd.f32 %v286, %v986
    %v1121 = vadd.f32 %v287, %v988
    %v1122 = vadd.f32 %v288, %v799
    %v1123 = vadd.f32 %v289, %v801
    %v1124 = vadd.f32 %v290, %v992
    %v1125 = vadd.f32 %v291, %v994
    %v1126 = vadd.f32 %v292, %v803
    %v1127 = vadd.f32 %v293, %v805
    %v1128 = vadd.f32 %v294, %v996
    %v1129 = vadd.f32 %v295, %v998
    %v1130 = vadd.f32 %v296, %v809
    %v1131 = vadd.f32 %v297, %v811
    %v1132 = vadd.f32 %v298, %v1002
    %v1133 = vadd.f32 %v299, %v1004
    %v1134 = vadd.f32 %v300, %v813
    %v1135 = vadd.f32 %v301, %v815
    %v1136 = vadd.f32 %v302, %v1006
    %v1137 = vadd.f32 %v303, %v1008
    %1138 = vst [vmem:[#allocation2] sm:$0xff] %v1010
    %1139 = vst [vmem:[#allocation2 + $0x8] sm:$0xff] %v1011
    %1140 = vst [vmem:[#allocation2 + $0x10] sm:$0xff] %v1012
    %1141 = vst [vmem:[#allocation2 + $0x18] sm:$0xff] %v1013
    %1142 = vst [vmem:[#allocation2 + $0x20] sm:$0xff] %v1014
    %1143 = vst [vmem:[#allocation2 + $0x28] sm:$0xff] %v1015
    %1144 = vst [vmem:[#allocation2 + $0x30] sm:$0xff] %v1016
    %1145 = vst [vmem:[#allocation2 + $0x38] sm:$0xff] %v1017
    %1146 = vst [vmem:[#allocation2 + $0x40] sm:$0xff] %v1018
    %1147 = vst [vmem:[#allocation2 + $0x48] sm:$0xff] %v1019
    %1148 = vst [vmem:[#allocation2 + $0x50] sm:$0xff] %v1020
    %1149 = vst [vmem:[#allocation2 + $0x58] sm:$0xff] %v1021
    %1150 = vst [vmem:[#allocation2 + $0x60] sm:$0xff] %v1022
    %1151 = vst [vmem:[#allocation2 + $0x68] sm:$0xff] %v1023
    %1152 = vst [vmem:[#allocation2 + $0x70] sm:$0xff] %v1024
    %1153 = vst [vmem:[#allocation2 + $0x78] sm:$0xff] %v1025
    %1154 = vst [vmem:[#allocation2 + $0x80] sm:$0xff] %v1026
    %1155 = vst [vmem:[#allocation2 + $0x88] sm:$0xff] %v1027
    %1156 = vst [vmem:[#allocation2 + $0x90] sm:$0xff] %v1028
    %1157 = vst [vmem:[#allocation2 + $0x98] sm:$0xff] %v1029
    %1158 = vst [vmem:[#allocation2 + $0xa0] sm:$0xff] %v1030
    %1159 = vst [vmem:[#allocation2 + $0xa8] sm:$0xff] %v1031
    %1160 = vst [vmem:[#allocation2 + $0xb0] sm:$0xff] %v1032
    %1161 = vst [vmem:[#allocation2 + $0xb8] sm:$0xff] %v1033
    %1162 = vst [vmem:[#allocation2 + $0xc0] sm:$0xff] %v1034
    %1163 = vst [vmem:[#allocation2 + $0xc8] sm:$0xff] %v1035
    %1164 = vst [vmem:[#allocation2 + $0xd0] sm:$0xff] %v1036
    %1165 = vst [vmem:[#allocation2 + $0xd8] sm:$0xff] %v1037
    %1166 = vst [vmem:[#allocation2 + $0xe0] sm:$0xff] %v1038
    %1167 = vst [vmem:[#allocation2 + $0xe8] sm:$0xff] %v1039
    %1168 = vst [vmem:[#allocation2 + $0xf0] sm:$0xff] %v1040
    %1169 = vst [vmem:[#allocation2 + $0xf8] sm:$0xff] %v1041
    %1170 = vst [vmem:[#allocation2 + $0x100] sm:$0xff] %v1042
    %1171 = vst [vmem:[#allocation2 + $0x108] sm:$0xff] %v1043
    %1172 = vst [vmem:[#allocation2 + $0x110] sm:$0xff] %v1044
    %1173 = vst [vmem:[#allocation2 + $0x118] sm:$0xff] %v1045
    %1174 = vst [vmem:[#allocation2 + $0x120] sm:$0xff] %v1046
    %1175 = vst [vmem:[#allocation2 + $0x128] sm:$0xff] %v1047
    %1176 = vst [vmem:[#allocation2 + $0x130] sm:$0xff] %v1048
    %1177 = vst [vmem:[#allocation2 + $0x138] sm:$0xff] %v1049
    %1178 = vst [vmem:[#allocation2 + $0x140] sm:$0xff] %v1050
    %1179 = vst [vmem:[#allocation2 + $0x148] sm:$0xff] %v1051
    %1180 = vst [vmem:[#allocation2 + $0x150] sm:$0xff] %v1052
    %1181 = vst [vmem:[#allocation2 + $0x158] sm:$0xff] %v1053
    %1182 = vst [vmem:[#allocation2 + $0x160] sm:$0xff] %v1054
    %1183 = vst [vmem:[#allocation2 + $0x168] sm:$0xff] %v1055
    %1184 = vst [vmem:[#allocation2 + $0x170] sm:$0xff] %v1056
    %1185 = vst [vmem:[#allocation2 + $0x178] sm:$0xff] %v1057
    %1186 = vst [vmem:[#allocation2 + $0x180] sm:$0xff] %v1058
    %1187 = vst [vmem:[#allocation2 + $0x188] sm:$0xff] %v1059
    %1188 = vst [vmem:[#allocation2 + $0x190] sm:$0xff] %v1060
    %1189 = vst [vmem:[#allocation2 + $0x198] sm:$0xff] %v1061
    %1190 = vst [vmem:[#allocation2 + $0x1a0] sm:$0xff] %v1062
    %1191 = vst [vmem:[#allocation2 + $0x1a8] sm:$0xff] %v1063
    %1192 = vst [vmem:[#allocation2 + $0x1b0] sm:$0xff] %v1064
    %1193 = vst [vmem:[#allocation2 + $0x1b8] sm:$0xff] %v1065
    %1194 = vst [vmem:[#allocation2 + $0x1c0] sm:$0xff] %v1066
    %1195 = vst [vmem:[#allocation2 + $0x1c8] sm:$0xff] %v1067
    %1196 = vst [vmem:[#allocation2 + $0x1d0] sm:$0xff] %v1068
    %1197 = vst [vmem:[#allocation2 + $0x1d8] sm:$0xff] %v1069
    %1198 = vst [vmem:[#allocation2 + $0x1e0] sm:$0xff] %v1070
    %1199 = vst [vmem:[#allocation2 + $0x1e8] sm:$0xff] %v1071
    %1200 = vst [vmem:[#allocation2 + $0x1f0] sm:$0xff] %v1072
    %1201 = vst [vmem:[#allocation2 + $0x1f8] sm:$0xff] %v1073
    %1202 = vst [vmem:[#allocation2 + $0x200] sm:$0xff] %v1074
    %1203 = vst [vmem:[#allocation2 + $0x208] sm:$0xff] %v1075
    %1204 = vst [vmem:[#allocation2 + $0x210] sm:$0xff] %v1076
    %1205 = vst [vmem:[#allocation2 + $0x218] sm:$0xff] %v1077
    %1206 = vst [vmem:[#allocation2 + $0x220] sm:$0xff] %v1078
    %1207 = vst [vmem:[#allocation2 + $0x228] sm:$0xff] %v1079
    %1208 = vst [vmem:[#allocation2 + $0x230] sm:$0xff] %v1080
    %1209 = vst [vmem:[#allocation2 + $0x238] sm:$0xff] %v1081
    %1210 = vst [vmem:[#allocation2 + $0x240] sm:$0xff] %v1082
    %1211 = vst [vmem:[#allocation2 + $0x248] sm:$0xff] %v1083
    %1212 = vst [vmem:[#allocation2 + $0x250] sm:$0xff] %v1084
    %1213 = vst [vmem:[#allocation2 + $0x258] sm:$0xff] %v1085
    %1214 = vst [vmem:[#allocation2 + $0x260] sm:$0xff] %v1086
    %1215 = vst [vmem:[#allocation2 + $0x268] sm:$0xff] %v1087
    %1216 = vst [vmem:[#allocation2 + $0x270] sm:$0xff] %v1088
    %1217 = vst [vmem:[#allocation2 + $0x278] sm:$0xff] %v1089
    %1218 = vst [vmem:[#allocation2 + $0x280] sm:$0xff] %v1090
    %1219 = vst [vmem:[#allocation2 + $0x288] sm:$0xff] %v1091
    %1220 = vst [vmem:[#allocation2 + $0x290] sm:$0xff] %v1092
    %1221 = vst [vmem:[#allocation2 + $0x298] sm:$0xff] %v1093
    %1222 = vst [vmem:[#allocation2 + $0x2a0] sm:$0xff] %v1094
    %1223 = vst [vmem:[#allocation2 + $0x2a8] sm:$0xff] %v1095
    %1224 = vst [vmem:[#allocation2 + $0x2b0] sm:$0xff] %v1096
    %1225 = vst [vmem:[#allocation2 + $0x2b8] sm:$0xff] %v1097
    %1226 = vst [vmem:[#allocation2 + $0x2c0] sm:$0xff] %v1098
    %1227 = vst [vmem:[#allocation2 + $0x2c8] sm:$0xff] %v1099
    %1228 = vst [vmem:[#allocation2 + $0x2d0] sm:$0xff] %v1100
    %1229 = vst [vmem:[#allocation2 + $0x2d8] sm:$0xff] %v1101
    %1230 = vst [vmem:[#allocation2 + $0x2e0] sm:$0xff] %v1102
    %1231 = vst [vmem:[#allocation2 + $0x2e8] sm:$0xff] %v1103
    %1232 = vst [vmem:[#allocation2 + $0x2f0] sm:$0xff] %v1104
    %1233 = vst [vmem:[#allocation2 + $0x2f8] sm:$0xff] %v1105
    %1234 = vst [vmem:[#allocation2 + $0x300] sm:$0xff] %v1106
    %1235 = vst [vmem:[#allocation2 + $0x308] sm:$0xff] %v1107
    %1236 = vst [vmem:[#allocation2 + $0x310] sm:$0xff] %v1108
    %1237 = vst [vmem:[#allocation2 + $0x318] sm:$0xff] %v1109
    %1238 = vst [vmem:[#allocation2 + $0x320] sm:$0xff] %v1110
    %1239 = vst [vmem:[#allocation2 + $0x328] sm:$0xff] %v1111
    %1240 = vst [vmem:[#allocation2 + $0x330] sm:$0xff] %v1112
    %1241 = vst [vmem:[#allocation2 + $0x338] sm:$0xff] %v1113
    %1242 = vst [vmem:[#allocation2 + $0x340] sm:$0xff] %v1114
    %1243 = vst [vmem:[#allocation2 + $0x348] sm:$0xff] %v1115
    %1244 = vst [vmem:[#allocation2 + $0x350] sm:$0xff] %v1116
    %1245 = vst [vmem:[#allocation2 + $0x358] sm:$0xff] %v1117
    %1246 = vst [vmem:[#allocation2 + $0x360] sm:$0xff] %v1118
    %1247 = vst [vmem:[#allocation2 + $0x368] sm:$0xff] %v1119
    %1248 = vst [vmem:[#allocation2 + $0x370] sm:$0xff] %v1120
    %1249 = vst [vmem:[#allocation2 + $0x378] sm:$0xff] %v1121
    %1250 = vst [vmem:[#allocation2 + $0x380] sm:$0xff] %v1122
    %1251 = vst [vmem:[#allocation2 + $0x388] sm:$0xff] %v1123
    %1252 = vst [vmem:[#allocation2 + $0x390] sm:$0xff] %v1124
    %1253 = vst [vmem:[#allocation2 + $0x398] sm:$0xff] %v1125
    %1254 = vst [vmem:[#allocation2 + $0x3a0] sm:$0xff] %v1126
    %1255 = vst [vmem:[#allocation2 + $0x3a8] sm:$0xff] %v1127
    %1256 = vst [vmem:[#allocation2 + $0x3b0] sm:$0xff] %v1128
    %1257 = vst [vmem:[#allocation2 + $0x3b8] sm:$0xff] %v1129
    %1258 = vst [vmem:[#allocation2 + $0x3c0] sm:$0xff] %v1130
    %1259 = vst [vmem:[#allocation2 + $0x3c8] sm:$0xff] %v1131
    %1260 = vst [vmem:[#allocation2 + $0x3d0] sm:$0xff] %v1132
    %1261 = vst [vmem:[#allocation2 + $0x3d8] sm:$0xff] %v1133
    %1262 = vst [vmem:[#allocation2 + $0x3e0] sm:$0xff] %v1134
    %1263 = vst [vmem:[#allocation2 + $0x3e8] sm:$0xff] %v1135
    %1264 = vst [vmem:[#allocation2 + $0x3f0] sm:$0xff] %v1136
    %1265 = vst [vmem:[#allocation2 + $0x3f8] sm:$0xff] %v1137
    // Predicated region
    $region26: #{tpu_custom_call.1} parent=1 // pred_check
      %p1266 = pneg %p44
    $region27: #{tpu_custom_call.1} parent=1 // pred_check_branch
      %1268 = sbr.rel (%p1266) target = $region29
    $region28: #{tpu_custom_call.1} parent=1 // pred_region
      %v1269 = vld [vmem:[#allocation2] sm:$0xff]
      %v1270 = vld [vmem:[#allocation2 + $0x8] sm:$0xff]
      %v1271 = vld [vmem:[#allocation2 + $0x10] sm:$0xff]
      %v1272 = vld [vmem:[#allocation2 + $0x18] sm:$0xff]
      %v1273 = vld [vmem:[#allocation2 + $0x20] sm:$0xff]
      %v1274 = vld [vmem:[#allocation2 + $0x28] sm:$0xff]
      %v1275 = vld [vmem:[#allocation2 + $0x30] sm:$0xff]
      %v1276 = vld [vmem:[#allocation2 + $0x38] sm:$0xff]
      %v1277 = vld [vmem:[#allocation2 + $0x40] sm:$0xff]
      %v1278 = vld [vmem:[#allocation2 + $0x48] sm:$0xff]
      %v1279 = vld [vmem:[#allocation2 + $0x50] sm:$0xff]
      %v1280 = vld [vmem:[#allocation2 + $0x58] sm:$0xff]
      %v1281 = vld [vmem:[#allocation2 + $0x60] sm:$0xff]
      %v1282 = vld [vmem:[#allocation2 + $0x68] sm:$0xff]
      %v1283 = vld [vmem:[#allocation2 + $0x70] sm:$0xff]
      %v1284 = vld [vmem:[#allocation2 + $0x78] sm:$0xff]
      %v1285 = vld [vmem:[#allocation2 + $0x80] sm:$0xff]
      %v1286 = vld [vmem:[#allocation2 + $0x88] sm:$0xff]
      %v1287 = vld [vmem:[#allocation2 + $0x90] sm:$0xff]
      %v1288 = vld [vmem:[#allocation2 + $0x98] sm:$0xff]
      %v1289 = vld [vmem:[#allocation2 + $0xa0] sm:$0xff]
      %v1290 = vld [vmem:[#allocation2 + $0xa8] sm:$0xff]
      %v1291 = vld [vmem:[#allocation2 + $0xb0] sm:$0xff]
      %v1292 = vld [vmem:[#allocation2 + $0xb8] sm:$0xff]
      %v1293 = vld [vmem:[#allocation2 + $0xc0] sm:$0xff]
      %v1294 = vld [vmem:[#allocation2 + $0xc8] sm:$0xff]
      %v1295 = vld [vmem:[#allocation2 + $0xd0] sm:$0xff]
      %v1296 = vld [vmem:[#allocation2 + $0xd8] sm:$0xff]
      %v1297 = vld [vmem:[#allocation2 + $0xe0] sm:$0xff]
      %v1298 = vld [vmem:[#allocation2 + $0xe8] sm:$0xff]
      %v1299 = vld [vmem:[#allocation2 + $0xf0] sm:$0xff]
      %v1300 = vld [vmem:[#allocation2 + $0xf8] sm:$0xff]
      %v1301 = vld [vmem:[#allocation2 + $0x100] sm:$0xff]
      %v1302 = vld [vmem:[#allocation2 + $0x108] sm:$0xff]
      %v1303 = vld [vmem:[#allocation2 + $0x110] sm:$0xff]
      %v1304 = vld [vmem:[#allocation2 + $0x118] sm:$0xff]
      %v1305 = vld [vmem:[#allocation2 + $0x120] sm:$0xff]
      %v1306 = vld [vmem:[#allocation2 + $0x128] sm:$0xff]
      %v1307 = vld [vmem:[#allocation2 + $0x130] sm:$0xff]
      %v1308 = vld [vmem:[#allocation2 + $0x138] sm:$0xff]
      %v1309 = vld [vmem:[#allocation2 + $0x140] sm:$0xff]
      %v1310 = vld [vmem:[#allocation2 + $0x148] sm:$0xff]
      %v1311 = vld [vmem:[#allocation2 + $0x150] sm:$0xff]
      %v1312 = vld [vmem:[#allocation2 + $0x158] sm:$0xff]
      %v1313 = vld [vmem:[#allocation2 + $0x160] sm:$0xff]
      %v1314 = vld [vmem:[#allocation2 + $0x168] sm:$0xff]
      %v1315 = vld [vmem:[#allocation2 + $0x170] sm:$0xff]
      %v1316 = vld [vmem:[#allocation2 + $0x178] sm:$0xff]
      %v1317 = vld [vmem:[#allocation2 + $0x180] sm:$0xff]
      %v1318 = vld [vmem:[#allocation2 + $0x188] sm:$0xff]
      %v1319 = vld [vmem:[#allocation2 + $0x190] sm:$0xff]
      %v1320 = vld [vmem:[#allocation2 + $0x198] sm:$0xff]
      %v1321 = vld [vmem:[#allocation2 + $0x1a0] sm:$0xff]
      %v1322 = vld [vmem:[#allocation2 + $0x1a8] sm:$0xff]
      %v1323 = vld [vmem:[#allocation2 + $0x1b0] sm:$0xff]
      %v1324 = vld [vmem:[#allocation2 + $0x1b8] sm:$0xff]
      %v1325 = vld [vmem:[#allocation2 + $0x1c0] sm:$0xff]
      %v1326 = vld [vmem:[#allocation2 + $0x1c8] sm:$0xff]
      %v1327 = vld [vmem:[#allocation2 + $0x1d0] sm:$0xff]
      %v1328 = vld [vmem:[#allocation2 + $0x1d8] sm:$0xff]
      %v1329 = vld [vmem:[#allocation2 + $0x1e0] sm:$0xff]
      %v1330 = vld [vmem:[#allocation2 + $0x1e8] sm:$0xff]
      %v1331 = vld [vmem:[#allocation2 + $0x1f0] sm:$0xff]
      %v1332 = vld [vmem:[#allocation2 + $0x1f8] sm:$0xff]
      %v1333 = vld [vmem:[#allocation2 + $0x200] sm:$0xff]
      %v1334 = vld [vmem:[#allocation2 + $0x208] sm:$0xff]
      %v1335 = vld [vmem:[#allocation2 + $0x210] sm:$0xff]
      %v1336 = vld [vmem:[#allocation2 + $0x218] sm:$0xff]
      %v1337 = vld [vmem:[#allocation2 + $0x220] sm:$0xff]
      %v1338 = vld [vmem:[#allocation2 + $0x228] sm:$0xff]
      %v1339 = vld [vmem:[#allocation2 + $0x230] sm:$0xff]
      %v1340 = vld [vmem:[#allocation2 + $0x238] sm:$0xff]
      %v1341 = vld [vmem:[#allocation2 + $0x240] sm:$0xff]
      %v1342 = vld [vmem:[#allocation2 + $0x248] sm:$0xff]
      %v1343 = vld [vmem:[#allocation2 + $0x250] sm:$0xff]
      %v1344 = vld [vmem:[#allocation2 + $0x258] sm:$0xff]
      %v1345 = vld [vmem:[#allocation2 + $0x260] sm:$0xff]
      %v1346 = vld [vmem:[#allocation2 + $0x268] sm:$0xff]
      %v1347 = vld [vmem:[#allocation2 + $0x270] sm:$0xff]
      %v1348 = vld [vmem:[#allocation2 + $0x278] sm:$0xff]
      %v1349 = vld [vmem:[#allocation2 + $0x280] sm:$0xff]
      %v1350 = vld [vmem:[#allocation2 + $0x288] sm:$0xff]
      %v1351 = vld [vmem:[#allocation2 + $0x290] sm:$0xff]
      %v1352 = vld [vmem:[#allocation2 + $0x298] sm:$0xff]
      %v1353 = vld [vmem:[#allocation2 + $0x2a0] sm:$0xff]
      %v1354 = vld [vmem:[#allocation2 + $0x2a8] sm:$0xff]
      %v1355 = vld [vmem:[#allocation2 + $0x2b0] sm:$0xff]
      %v1356 = vld [vmem:[#allocation2 + $0x2b8] sm:$0xff]
      %v1357 = vld [vmem:[#allocation2 + $0x2c0] sm:$0xff]
      %v1358 = vld [vmem:[#allocation2 + $0x2c8] sm:$0xff]
      %v1359 = vld [vmem:[#allocation2 + $0x2d0] sm:$0xff]
      %v1360 = vld [vmem:[#allocation2 + $0x2d8] sm:$0xff]
      %v1361 = vld [vmem:[#allocation2 + $0x2e0] sm:$0xff]
      %v1362 = vld [vmem:[#allocation2 + $0x2e8] sm:$0xff]
      %v1363 = vld [vmem:[#allocation2 + $0x2f0] sm:$0xff]
      %v1364 = vld [vmem:[#allocation2 + $0x2f8] sm:$0xff]
      %v1365 = vld [vmem:[#allocation2 + $0x300] sm:$0xff]
      %v1366 = vld [vmem:[#allocation2 + $0x308] sm:$0xff]
      %v1367 = vld [vmem:[#allocation2 + $0x310] sm:$0xff]
      %v1368 = vld [vmem:[#allocation2 + $0x318] sm:$0xff]
      %v1369 = vld [vmem:[#allocation2 + $0x320] sm:$0xff]
      %v1370 = vld [vmem:[#allocation2 + $0x328] sm:$0xff]
      %v1371 = vld [vmem:[#allocation2 + $0x330] sm:$0xff]
      %v1372 = vld [vmem:[#allocation2 + $0x338] sm:$0xff]
      %v1373 = vld [vmem:[#allocation2 + $0x340] sm:$0xff]
      %v1374 = vld [vmem:[#allocation2 + $0x348] sm:$0xff]
      %v1375 = vld [vmem:[#allocation2 + $0x350] sm:$0xff]
      %v1376 = vld [vmem:[#allocation2 + $0x358] sm:$0xff]
      %v1377 = vld [vmem:[#allocation2 + $0x360] sm:$0xff]
      %v1378 = vld [vmem:[#allocation2 + $0x368] sm:$0xff]
      %v1379 = vld [vmem:[#allocation2 + $0x370] sm:$0xff]
      %v1380 = vld [vmem:[#allocation2 + $0x378] sm:$0xff]
      %v1381 = vld [vmem:[#allocation2 + $0x380] sm:$0xff]
      %v1382 = vld [vmem:[#allocation2 + $0x388] sm:$0xff]
      %v1383 = vld [vmem:[#allocation2 + $0x390] sm:$0xff]
      %v1384 = vld [vmem:[#allocation2 + $0x398] sm:$0xff]
      %v1385 = vld [vmem:[#allocation2 + $0x3a0] sm:$0xff]
      %v1386 = vld [vmem:[#allocation2 + $0x3a8] sm:$0xff]
      %v1387 = vld [vmem:[#allocation2 + $0x3b0] sm:$0xff]
      %v1388 = vld [vmem:[#allocation2 + $0x3b8] sm:$0xff]
      %v1389 = vld [vmem:[#allocation2 + $0x3c0] sm:$0xff]
      %v1390 = vld [vmem:[#allocation2 + $0x3c8] sm:$0xff]
      %v1391 = vld [vmem:[#allocation2 + $0x3d0] sm:$0xff]
      %v1392 = vld [vmem:[#allocation2 + $0x3d8] sm:$0xff]
      %v1393 = vld [vmem:[#allocation2 + $0x3e0] sm:$0xff]
      %v1394 = vld [vmem:[#allocation2 + $0x3e8] sm:$0xff]
      %v1395 = vld [vmem:[#allocation2 + $0x3f0] sm:$0xff]
      %v1396 = vld [vmem:[#allocation2 + $0x3f8] sm:$0xff]
      %v1397 = vld [vmem:[%s2] sm:$0xf]
      %v1399 = vlaneseq
      %v1400 = vshrl.u32 %v1399, 7
      %v1401 = vsub.s32 0, %v1400
      %v1402 = vrot.slane %v1397, %v1401
      %v1403 = vlaneseq
      %v1404 = vshrl.u32 %v1403, 7
      %v1405 = vsub.s32 1, %v1404
      %v1406 = vrot.slane %v1397, %v1405
      %v1407 = vlaneseq
      %v1408 = vshrl.u32 %v1407, 7
      %v1409 = vsub.s32 2, %v1408
      %v1410 = vrot.slane %v1397, %v1409
      %v1411 = vlaneseq
      %v1412 = vshrl.u32 %v1411, 7
      %v1413 = vsub.s32 3, %v1412
      %v1414 = vrot.slane %v1397, %v1413
      %v1419 = vadd.f32 %v1269, %v1402
      %v1420 = vadd.f32 %v1270, %v1406
      %v1421 = vadd.f32 %v1271, %v1410
      %v1422 = vadd.f32 %v1272, %v1414
      %v1423 = vadd.f32 %v1273, %v1402
      %v1424 = vadd.f32 %v1274, %v1406
      %v1425 = vadd.f32 %v1275, %v1410
      %v1426 = vadd.f32 %v1276, %v1414
      %v1427 = vadd.f32 %v1277, %v1402
      %v1428 = vadd.f32 %v1278, %v1406
      %v1429 = vadd.f32 %v1279, %v1410
      %v1430 = vadd.f32 %v1280, %v1414
      %v1431 = vadd.f32 %v1281, %v1402
      %v1432 = vadd.f32 %v1282, %v1406
      %v1433 = vadd.f32 %v1283, %v1410
      %v1434 = vadd.f32 %v1284, %v1414
      %v1435 = vadd.f32 %v1285, %v1402
      %v1436 = vadd.f32 %v1286, %v1406
      %v1437 = vadd.f32 %v1287, %v1410
      %v1438 = vadd.f32 %v1288, %v1414
      %v1439 = vadd.f32 %v1289, %v1402
      %v1440 = vadd.f32 %v1290, %v1406
      %v1441 = vadd.f32 %v1291, %v1410
      %v1442 = vadd.f32 %v1292, %v1414
      %v1443 = vadd.f32 %v1293, %v1402
      %v1444 = vadd.f32 %v1294, %v1406
      %v1445 = vadd.f32 %v1295, %v1410
      %v1446 = vadd.f32 %v1296, %v1414
      %v1447 = vadd.f32 %v1297, %v1402
      %v1448 = vadd.f32 %v1298, %v1406
      %v1449 = vadd.f32 %v1299, %v1410
      %v1450 = vadd.f32 %v1300, %v1414
      %v1451 = vadd.f32 %v1301, %v1402
      %v1452 = vadd.f32 %v1302, %v1406
      %v1453 = vadd.f32 %v1303, %v1410
      %v1454 = vadd.f32 %v1304, %v1414
      %v1455 = vadd.f32 %v1305, %v1402
      %v1456 = vadd.f32 %v1306, %v1406
      %v1457 = vadd.f32 %v1307, %v1410
      %v1458 = vadd.f32 %v1308, %v1414
      %v1459 = vadd.f32 %v1309, %v1402
      %v1460 = vadd.f32 %v1310, %v1406
      %v1461 = vadd.f32 %v1311, %v1410
      %v1462 = vadd.f32 %v1312, %v1414
      %v1463 = vadd.f32 %v1313, %v1402
      %v1464 = vadd.f32 %v1314, %v1406
      %v1465 = vadd.f32 %v1315, %v1410
      %v1466 = vadd.f32 %v1316, %v1414
      %v1467 = vadd.f32 %v1317, %v1402
      %v1468 = vadd.f32 %v1318, %v1406
      %v1469 = vadd.f32 %v1319, %v1410
      %v1470 = vadd.f32 %v1320, %v1414
      %v1471 = vadd.f32 %v1321, %v1402
      %v1472 = vadd.f32 %v1322, %v1406
      %v1473 = vadd.f32 %v1323, %v1410
      %v1474 = vadd.f32 %v1324, %v1414
      %v1475 = vadd.f32 %v1325, %v1402
      %v1476 = vadd.f32 %v1326, %v1406
      %v1477 = vadd.f32 %v1327, %v1410
      %v1478 = vadd.f32 %v1328, %v1414
      %v1479 = vadd.f32 %v1329, %v1402
      %v1480 = vadd.f32 %v1330, %v1406
      %v1481 = vadd.f32 %v1331, %v1410
      %v1482 = vadd.f32 %v1332, %v1414
      %v1483 = vadd.f32 %v1333, %v1402
      %v1484 = vadd.f32 %v1334, %v1406
      %v1485 = vadd.f32 %v1335, %v1410
      %v1486 = vadd.f32 %v1336, %v1414
      %v1487 = vadd.f32 %v1337, %v1402
      %v1488 = vadd.f32 %v1338, %v1406
      %v1489 = vadd.f32 %v1339, %v1410
      %v1490 = vadd.f32 %v1340, %v1414
      %v1491 = vadd.f32 %v1341, %v1402
      %v1492 = vadd.f32 %v1342, %v1406
      %v1493 = vadd.f32 %v1343, %v1410
      %v1494 = vadd.f32 %v1344, %v1414
      %v1495 = vadd.f32 %v1345, %v1402
      %v1496 = vadd.f32 %v1346, %v1406
      %v1497 = vadd.f32 %v1347, %v1410
      %v1498 = vadd.f32 %v1348, %v1414
      %v1499 = vadd.f32 %v1349, %v1402
      %v1500 = vadd.f32 %v1350, %v1406
      %v1501 = vadd.f32 %v1351, %v1410
      %v1502 = vadd.f32 %v1352, %v1414
      %v1503 = vadd.f32 %v1353, %v1402
      %v1504 = vadd.f32 %v1354, %v1406
      %v1505 = vadd.f32 %v1355, %v1410
      %v1506 = vadd.f32 %v1356, %v1414
      %v1507 = vadd.f32 %v1357, %v1402
      %v1508 = vadd.f32 %v1358, %v1406
      %v1509 = vadd.f32 %v1359, %v1410
      %v1510 = vadd.f32 %v1360, %v1414
      %v1511 = vadd.f32 %v1361, %v1402
      %v1512 = vadd.f32 %v1362, %v1406
      %v1513 = vadd.f32 %v1363, %v1410
      %v1514 = vadd.f32 %v1364, %v1414
      %v1515 = vadd.f32 %v1365, %v1402
      %v1516 = vadd.f32 %v1366, %v1406
      %v1517 = vadd.f32 %v1367, %v1410
      %v1518 = vadd.f32 %v1368, %v1414
      %v1519 = vadd.f32 %v1369, %v1402
      %v1520 = vadd.f32 %v1370, %v1406
      %v1521 = vadd.f32 %v1371, %v1410
      %v1522 = vadd.f32 %v1372, %v1414
      %v1523 = vadd.f32 %v1373, %v1402
      %v1524 = vadd.f32 %v1374, %v1406
      %v1525 = vadd.f32 %v1375, %v1410
      %v1526 = vadd.f32 %v1376, %v1414
      %v1527 = vadd.f32 %v1377, %v1402
      %v1528 = vadd.f32 %v1378, %v1406
      %v1529 = vadd.f32 %v1379, %v1410
      %v1530 = vadd.f32 %v1380, %v1414
      %v1531 = vadd.f32 %v1381, %v1402
      %v1532 = vadd.f32 %v1382, %v1406
      %v1533 = vadd.f32 %v1383, %v1410
      %v1534 = vadd.f32 %v1384, %v1414
      %v1535 = vadd.f32 %v1385, %v1402
      %v1536 = vadd.f32 %v1386, %v1406
      %v1537 = vadd.f32 %v1387, %v1410
      %v1538 = vadd.f32 %v1388, %v1414
      %v1539 = vadd.f32 %v1389, %v1402
      %v1540 = vadd.f32 %v1390, %v1406
      %v1541 = vadd.f32 %v1391, %v1410
      %v1542 = vadd.f32 %v1392, %v1414
      %v1543 = vadd.f32 %v1393, %v1402
      %v1544 = vadd.f32 %v1394, %v1406
      %v1545 = vadd.f32 %v1395, %v1410
      %v1546 = vadd.f32 %v1396, %v1414
      %v1547 = vpack.c.bf16 %v1423, %v1419
      %v1548 = vpack.c.bf16 %v1424, %v1420
      %v1549 = vpack.c.bf16 %v1425, %v1421
      %v1550 = vpack.c.bf16 %v1426, %v1422
      %v1551 = vpack.c.bf16 %v1431, %v1427
      %v1552 = vpack.c.bf16 %v1432, %v1428
      %v1553 = vpack.c.bf16 %v1433, %v1429
      %v1554 = vpack.c.bf16 %v1434, %v1430
      %v1555 = vpack.c.bf16 %v1439, %v1435
      %v1556 = vpack.c.bf16 %v1440, %v1436
      %v1557 = vpack.c.bf16 %v1441, %v1437
      %v1558 = vpack.c.bf16 %v1442, %v1438
      %v1559 = vpack.c.bf16 %v1447, %v1443
      %v1560 = vpack.c.bf16 %v1448, %v1444
      %v1561 = vpack.c.bf16 %v1449, %v1445
      %v1562 = vpack.c.bf16 %v1450, %v1446
      %v1563 = vpack.c.bf16 %v1455, %v1451
      %v1564 = vpack.c.bf16 %v1456, %v1452
      %v1565 = vpack.c.bf16 %v1457, %v1453
      %v1566 = vpack.c.bf16 %v1458, %v1454
      %v1567 = vpack.c.bf16 %v1463, %v1459
      %v1568 = vpack.c.bf16 %v1464, %v1460
      %v1569 = vpack.c.bf16 %v1465, %v1461
      %v1570 = vpack.c.bf16 %v1466, %v1462
      %v1571 = vpack.c.bf16 %v1471, %v1467
      %v1572 = vpack.c.bf16 %v1472, %v1468
      %v1573 = vpack.c.bf16 %v1473, %v1469
      %v1574 = vpack.c.bf16 %v1474, %v1470
      %v1575 = vpack.c.bf16 %v1479, %v1475
      %v1576 = vpack.c.bf16 %v1480, %v1476
      %v1577 = vpack.c.bf16 %v1481, %v1477
      %v1578 = vpack.c.bf16 %v1482, %v1478
      %v1579 = vpack.c.bf16 %v1487, %v1483
      %v1580 = vpack.c.bf16 %v1488, %v1484
      %v1581 = vpack.c.bf16 %v1489, %v1485
      %v1582 = vpack.c.bf16 %v1490, %v1486
      %v1583 = vpack.c.bf16 %v1495, %v1491
      %v1584 = vpack.c.bf16 %v1496, %v1492
      %v1585 = vpack.c.bf16 %v1497, %v1493
      %v1586 = vpack.c.bf16 %v1498, %v1494
      %v1587 = vpack.c.bf16 %v1503, %v1499
      %v1588 = vpack.c.bf16 %v1504, %v1500
      %v1589 = vpack.c.bf16 %v1505, %v1501
      %v1590 = vpack.c.bf16 %v1506, %v1502
      %v1591 = vpack.c.bf16 %v1511, %v1507
      %v1592 = vpack.c.bf16 %v1512, %v1508
      %v1593 = vpack.c.bf16 %v1513, %v1509
      %v1594 = vpack.c.bf16 %v1514, %v1510
      %v1595 = vpack.c.bf16 %v1519, %v1515
      %v1596 = vpack.c.bf16 %v1520, %v1516
      %v1597 = vpack.c.bf16 %v1521, %v1517
      %v1598 = vpack.c.bf16 %v1522, %v1518
      %v1599 = vpack.c.bf16 %v1527, %v1523
      %v1600 = vpack.c.bf16 %v1528, %v1524
      %v1601 = vpack.c.bf16 %v1529, %v1525
      %v1602 = vpack.c.bf16 %v1530, %v1526
      %v1603 = vpack.c.bf16 %v1535, %v1531
      %v1604 = vpack.c.bf16 %v1536, %v1532
      %v1605 = vpack.c.bf16 %v1537, %v1533
      %v1606 = vpack.c.bf16 %v1538, %v1534
      %v1607 = vpack.c.bf16 %v1543, %v1539
      %v1608 = vpack.c.bf16 %v1544, %v1540
      %v1609 = vpack.c.bf16 %v1545, %v1541
      %v1610 = vpack.c.bf16 %v1546, %v1542
      %v1675 = vunpack.c.l.b16 %v1547
      %v1676 = vunpack.c.l.b16 %v1548
      %v1677 = vunpack.c.l.b16 %v1549
      %v1678 = vunpack.c.l.b16 %v1550
      %v1679 = vunpack.c.h.b16 %v1547
      %v1680 = vunpack.c.h.b16 %v1548
      %v1681 = vunpack.c.h.b16 %v1549
      %v1682 = vunpack.c.h.b16 %v1550
      %v1683 = vunpack.c.l.b16 %v1551
      %v1684 = vunpack.c.l.b16 %v1552
      %v1685 = vunpack.c.l.b16 %v1553
      %v1686 = vunpack.c.l.b16 %v1554
      %v1687 = vunpack.c.h.b16 %v1551
      %v1688 = vunpack.c.h.b16 %v1552
      %v1689 = vunpack.c.h.b16 %v1553
      %v1690 = vunpack.c.h.b16 %v1554
      %v1691 = vunpack.c.l.b16 %v1555
      %v1692 = vunpack.c.l.b16 %v1556
      %v1693 = vunpack.c.l.b16 %v1557
      %v1694 = vunpack.c.l.b16 %v1558
      %v1695 = vunpack.c.h.b16 %v1555
      %v1696 = vunpack.c.h.b16 %v1556
      %v1697 = vunpack.c.h.b16 %v1557
      %v1698 = vunpack.c.h.b16 %v1558
      %v1699 = vunpack.c.l.b16 %v1559
      %v1700 = vunpack.c.l.b16 %v1560
      %v1701 = vunpack.c.l.b16 %v1561
      %v1702 = vunpack.c.l.b16 %v1562
      %v1703 = vunpack.c.h.b16 %v1559
      %v1704 = vunpack.c.h.b16 %v1560
      %v1705 = vunpack.c.h.b16 %v1561
      %v1706 = vunpack.c.h.b16 %v1562
      %v1707 = vunpack.c.l.b16 %v1563
      %v1708 = vunpack.c.l.b16 %v1564
      %v1709 = vunpack.c.l.b16 %v1565
      %v1710 = vunpack.c.l.b16 %v1566
      %v1711 = vunpack.c.h.b16 %v1563
      %v1712 = vunpack.c.h.b16 %v1564
      %v1713 = vunpack.c.h.b16 %v1565
      %v1714 = vunpack.c.h.b16 %v1566
      %v1715 = vunpack.c.l.b16 %v1567
      %v1716 = vunpack.c.l.b16 %v1568
      %v1717 = vunpack.c.l.b16 %v1569
      %v1718 = vunpack.c.l.b16 %v1570
      %v1719 = vunpack.c.h.b16 %v1567
      %v1720 = vunpack.c.h.b16 %v1568
      %v1721 = vunpack.c.h.b16 %v1569
      %v1722 = vunpack.c.h.b16 %v1570
      %v1723 = vunpack.c.l.b16 %v1571
      %v1724 = vunpack.c.l.b16 %v1572
      %v1725 = vunpack.c.l.b16 %v1573
      %v1726 = vunpack.c.l.b16 %v1574
      %v1727 = vunpack.c.h.b16 %v1571
      %v1728 = vunpack.c.h.b16 %v1572
      %v1729 = vunpack.c.h.b16 %v1573
      %v1730 = vunpack.c.h.b16 %v1574
      %v1731 = vunpack.c.l.b16 %v1575
      %v1732 = vunpack.c.l.b16 %v1576
      %v1733 = vunpack.c.l.b16 %v1577
      %v1734 = vunpack.c.l.b16 %v1578
      %v1735 = vunpack.c.h.b16 %v1575
      %v1736 = vunpack.c.h.b16 %v1576
      %v1737 = vunpack.c.h.b16 %v1577
      %v1738 = vunpack.c.h.b16 %v1578
      %v1739 = vunpack.c.l.b16 %v1579
      %v1740 = vunpack.c.l.b16 %v1580
      %v1741 = vunpack.c.l.b16 %v1581
      %v1742 = vunpack.c.l.b16 %v1582
      %v1743 = vunpack.c.h.b16 %v1579
      %v1744 = vunpack.c.h.b16 %v1580
      %v1745 = vunpack.c.h.b16 %v1581
      %v1746 = vunpack.c.h.b16 %v1582
      %v1747 = vunpack.c.l.b16 %v1583
      %v1748 = vunpack.c.l.b16 %v1584
      %v1749 = vunpack.c.l.b16 %v1585
      %v1750 = vunpack.c.l.b16 %v1586
      %v1751 = vunpack.c.h.b16 %v1583
      %v1752 = vunpack.c.h.b16 %v1584
      %v1753 = vunpack.c.h.b16 %v1585
      %v1754 = vunpack.c.h.b16 %v1586
      %v1755 = vunpack.c.l.b16 %v1587
      %v1756 = vunpack.c.l.b16 %v1588
      %v1757 = vunpack.c.l.b16 %v1589
      %v1758 = vunpack.c.l.b16 %v1590
      %v1759 = vunpack.c.h.b16 %v1587
      %v1760 = vunpack.c.h.b16 %v1588
      %v1761 = vunpack.c.h.b16 %v1589
      %v1762 = vunpack.c.h.b16 %v1590
      %v1763 = vunpack.c.l.b16 %v1591
      %v1764 = vunpack.c.l.b16 %v1592
      %v1765 = vunpack.c.l.b16 %v1593
      %v1766 = vunpack.c.l.b16 %v1594
      %v1767 = vunpack.c.h.b16 %v1591
      %v1768 = vunpack.c.h.b16 %v1592
      %v1769 = vunpack.c.h.b16 %v1593
      %v1770 = vunpack.c.h.b16 %v1594
      %v1771 = vunpack.c.l.b16 %v1595
      %v1772 = vunpack.c.l.b16 %v1596
      %v1773 = vunpack.c.l.b16 %v1597
      %v1774 = vunpack.c.l.b16 %v1598
      %v1775 = vunpack.c.h.b16 %v1595
      %v1776 = vunpack.c.h.b16 %v1596
      %v1777 = vunpack.c.h.b16 %v1597
      %v1778 = vunpack.c.h.b16 %v1598
      %v1779 = vunpack.c.l.b16 %v1599
      %v1780 = vunpack.c.l.b16 %v1600
      %v1781 = vunpack.c.l.b16 %v1601
      %v1782 = vunpack.c.l.b16 %v1602
      %v1783 = vunpack.c.h.b16 %v1599
      %v1784 = vunpack.c.h.b16 %v1600
      %v1785 = vunpack.c.h.b16 %v1601
      %v1786 = vunpack.c.h.b16 %v1602
      %v1787 = vunpack.c.l.b16 %v1603
      %v1788 = vunpack.c.l.b16 %v1604
      %v1789 = vunpack.c.l.b16 %v1605
      %v1790 = vunpack.c.l.b16 %v1606
      %v1791 = vunpack.c.h.b16 %v1603
      %v1792 = vunpack.c.h.b16 %v1604
      %v1793 = vunpack.c.h.b16 %v1605
      %v1794 = vunpack.c.h.b16 %v1606
      %v1795 = vunpack.c.l.b16 %v1607
      %v1796 = vunpack.c.l.b16 %v1608
      %v1797 = vunpack.c.l.b16 %v1609
      %v1798 = vunpack.c.l.b16 %v1610
      %v1799 = vunpack.c.h.b16 %v1607
      %v1800 = vunpack.c.h.b16 %v1608
      %v1801 = vunpack.c.h.b16 %v1609
      %v1802 = vunpack.c.h.b16 %v1610
      %v1803 = vpack.c.b16 %v1676, %v1675
      %v1804 = vpack.c.b16 %v1678, %v1677
      %v1805 = vpack.c.b16 %v1680, %v1679
      %v1806 = vpack.c.b16 %v1682, %v1681
      %v1807 = vpack.c.b16 %v1684, %v1683
      %v1808 = vpack.c.b16 %v1686, %v1685
      %v1809 = vpack.c.b16 %v1688, %v1687
      %v1810 = vpack.c.b16 %v1690, %v1689
      %v1811 = vpack.c.b16 %v1692, %v1691
      %v1812 = vpack.c.b16 %v1694, %v1693
      %v1813 = vpack.c.b16 %v1696, %v1695
      %v1814 = vpack.c.b16 %v1698, %v1697
      %v1815 = vpack.c.b16 %v1700, %v1699
      %v1816 = vpack.c.b16 %v1702, %v1701
      %v1817 = vpack.c.b16 %v1704, %v1703
      %v1818 = vpack.c.b16 %v1706, %v1705
      %v1819 = vpack.c.b16 %v1708, %v1707
      %v1820 = vpack.c.b16 %v1710, %v1709
      %v1821 = vpack.c.b16 %v1712, %v1711
      %v1822 = vpack.c.b16 %v1714, %v1713
      %v1823 = vpack.c.b16 %v1716, %v1715
      %v1824 = vpack.c.b16 %v1718, %v1717
      %v1825 = vpack.c.b16 %v1720, %v1719
      %v1826 = vpack.c.b16 %v1722, %v1721
      %v1827 = vpack.c.b16 %v1724, %v1723
      %v1828 = vpack.c.b16 %v1726, %v1725
      %v1829 = vpack.c.b16 %v1728, %v1727
      %v1830 = vpack.c.b16 %v1730, %v1729
      %v1831 = vpack.c.b16 %v1732, %v1731
      %v1832 = vpack.c.b16 %v1734, %v1733
      %v1833 = vpack.c.b16 %v1736, %v1735
      %v1834 = vpack.c.b16 %v1738, %v1737
      %v1835 = vpack.c.b16 %v1740, %v1739
      %v1836 = vpack.c.b16 %v1742, %v1741
      %v1837 = vpack.c.b16 %v1744, %v1743
      %v1838 = vpack.c.b16 %v1746, %v1745
      %v1839 = vpack.c.b16 %v1748, %v1747
      %v1840 = vpack.c.b16 %v1750, %v1749
      %v1841 = vpack.c.b16 %v1752, %v1751
      %v1842 = vpack.c.b16 %v1754, %v1753
      %v1843 = vpack.c.b16 %v1756, %v1755
      %v1844 = vpack.c.b16 %v1758, %v1757
      %v1845 = vpack.c.b16 %v1760, %v1759
      %v1846 = vpack.c.b16 %v1762, %v1761
      %v1847 = vpack.c.b16 %v1764, %v1763
      %v1848 = vpack.c.b16 %v1766, %v1765
      %v1849 = vpack.c.b16 %v1768, %v1767
      %v1850 = vpack.c.b16 %v1770, %v1769
      %v1851 = vpack.c.b16 %v1772, %v1771
      %v1852 = vpack.c.b16 %v1774, %v1773
      %v1853 = vpack.c.b16 %v1776, %v1775
      %v1854 = vpack.c.b16 %v1778, %v1777
      %v1855 = vpack.c.b16 %v1780, %v1779
      %v1856 = vpack.c.b16 %v1782, %v1781
      %v1857 = vpack.c.b16 %v1784, %v1783
      %v1858 = vpack.c.b16 %v1786, %v1785
      %v1859 = vpack.c.b16 %v1788, %v1787
      %v1860 = vpack.c.b16 %v1790, %v1789
      %v1861 = vpack.c.b16 %v1792, %v1791
      %v1862 = vpack.c.b16 %v1794, %v1793
      %v1863 = vpack.c.b16 %v1796, %v1795
      %v1864 = vpack.c.b16 %v1798, %v1797
      %v1865 = vpack.c.b16 %v1800, %v1799
      %v1866 = vpack.c.b16 %v1802, %v1801
      %1931 = vst [vmem:[#allocation8] sm:$0xff] %v1803
      %1932 = vst [vmem:[#allocation8 + $0x8] sm:$0xff] %v1804
      %1933 = vst [vmem:[#allocation8 + $0x10] sm:$0xff] %v1805
      %1934 = vst [vmem:[#allocation8 + $0x18] sm:$0xff] %v1806
      %1935 = vst [vmem:[#allocation8 + $0x20] sm:$0xff] %v1807
      %1936 = vst [vmem:[#allocation8 + $0x28] sm:$0xff] %v1808
      %1937 = vst [vmem:[#allocation8 + $0x30] sm:$0xff] %v1809
      %1938 = vst [vmem:[#allocation8 + $0x38] sm:$0xff] %v1810
      %1939 = vst [vmem:[#allocation8 + $0x40] sm:$0xff] %v1811
      %1940 = vst [vmem:[#allocation8 + $0x48] sm:$0xff] %v1812
      %1941 = vst [vmem:[#allocation8 + $0x50] sm:$0xff] %v1813
      %1942 = vst [vmem:[#allocation8 + $0x58] sm:$0xff] %v1814
      %1943 = vst [vmem:[#allocation8 + $0x60] sm:$0xff] %v1815
      %1944 = vst [vmem:[#allocation8 + $0x68] sm:$0xff] %v1816
      %1945 = vst [vmem:[#allocation8 + $0x70] sm:$0xff] %v1817
      %1946 = vst [vmem:[#allocation8 + $0x78] sm:$0xff] %v1818
      %1947 = vst [vmem:[#allocation8 + $0x80] sm:$0xff] %v1819
      %1948 = vst [vmem:[#allocation8 + $0x88] sm:$0xff] %v1820
      %1949 = vst [vmem:[#allocation8 + $0x90] sm:$0xff] %v1821
      %1950 = vst [vmem:[#allocation8 + $0x98] sm:$0xff] %v1822
      %1951 = vst [vmem:[#allocation8 + $0xa0] sm:$0xff] %v1823
      %1952 = vst [vmem:[#allocation8 + $0xa8] sm:$0xff] %v1824
      %1953 = vst [vmem:[#allocation8 + $0xb0] sm:$0xff] %v1825
      %1954 = vst [vmem:[#allocation8 + $0xb8] sm:$0xff] %v1826
      %1955 = vst [vmem:[#allocation8 + $0xc0] sm:$0xff] %v1827
      %1956 = vst [vmem:[#allocation8 + $0xc8] sm:$0xff] %v1828
      %1957 = vst [vmem:[#allocation8 + $0xd0] sm:$0xff] %v1829
      %1958 = vst [vmem:[#allocation8 + $0xd8] sm:$0xff] %v1830
      %1959 = vst [vmem:[#allocation8 + $0xe0] sm:$0xff] %v1831
      %1960 = vst [vmem:[#allocation8 + $0xe8] sm:$0xff] %v1832
      %1961 = vst [vmem:[#allocation8 + $0xf0] sm:$0xff] %v1833
      %1962 = vst [vmem:[#allocation8 + $0xf8] sm:$0xff] %v1834
      %1963 = vst [vmem:[#allocation8 + $0x100] sm:$0xff] %v1835
      %1964 = vst [vmem:[#allocation8 + $0x108] sm:$0xff] %v1836
      %1965 = vst [vmem:[#allocation8 + $0x110] sm:$0xff] %v1837
      %1966 = vst [vmem:[#allocation8 + $0x118] sm:$0xff] %v1838
      %1967 = vst [vmem:[#allocation8 + $0x120] sm:$0xff] %v1839
      %1968 = vst [vmem:[#allocation8 + $0x128] sm:$0xff] %v1840
      %1969 = vst [vmem:[#allocation8 + $0x130] sm:$0xff] %v1841
      %1970 = vst [vmem:[#allocation8 + $0x138] sm:$0xff] %v1842
      %1971 = vst [vmem:[#allocation8 + $0x140] sm:$0xff] %v1843
      %1972 = vst [vmem:[#allocation8 + $0x148] sm:$0xff] %v1844
      %1973 = vst [vmem:[#allocation8 + $0x150] sm:$0xff] %v1845
      %1974 = vst [vmem:[#allocation8 + $0x158] sm:$0xff] %v1846
      %1975 = vst [vmem:[#allocation8 + $0x160] sm:$0xff] %v1847
      %1976 = vst [vmem:[#allocation8 + $0x168] sm:$0xff] %v1848
      %1977 = vst [vmem:[#allocation8 + $0x170] sm:$0xff] %v1849
      %1978 = vst [vmem:[#allocation8 + $0x178] sm:$0xff] %v1850
      %1979 = vst [vmem:[#allocation8 + $0x180] sm:$0xff] %v1851
      %1980 = vst [vmem:[#allocation8 + $0x188] sm:$0xff] %v1852
      %1981 = vst [vmem:[#allocation8 + $0x190] sm:$0xff] %v1853
      %1982 = vst [vmem:[#allocation8 + $0x198] sm:$0xff] %v1854
      %1983 = vst [vmem:[#allocation8 + $0x1a0] sm:$0xff] %v1855
      %1984 = vst [vmem:[#allocation8 + $0x1a8] sm:$0xff] %v1856
      %1985 = vst [vmem:[#allocation8 + $0x1b0] sm:$0xff] %v1857
      %1986 = vst [vmem:[#allocation8 + $0x1b8] sm:$0xff] %v1858
      %1987 = vst [vmem:[#allocation8 + $0x1c0] sm:$0xff] %v1859
      %1988 = vst [vmem:[#allocation8 + $0x1c8] sm:$0xff] %v1860
      %1989 = vst [vmem:[#allocation8 + $0x1d0] sm:$0xff] %v1861
      %1990 = vst [vmem:[#allocation8 + $0x1d8] sm:$0xff] %v1862
      %1991 = vst [vmem:[#allocation8 + $0x1e0] sm:$0xff] %v1863
      %1992 = vst [vmem:[#allocation8 + $0x1e8] sm:$0xff] %v1864
      %1993 = vst [vmem:[#allocation8 + $0x1f0] sm:$0xff] %v1865
      %1994 = vst [vmem:[#allocation8 + $0x1f8] sm:$0xff] %v1866
    $region29: #{tpu_custom_call.1} parent=1 // pred_fallthru
      _
    // Predicated region
    $region30: #{tpu_custom_call.1} parent=1 // pred_check
      _
    $region31: #{tpu_custom_call.1} parent=1 // pred_check_branch
      %1996 = sbr.rel (0) target = $region33
    $region32: #{tpu_custom_call.1} parent=1 // pred_region
      %s1998 = ssub.s32 8192, 8192
      %1999 = vsyncadd [#allocation5], %s1998
      %s2000 = sshll.u32 [#allocation8], 4
      %s2001 = int_to_ptr.vmem [resolvable:$true] %s2000
      %2006 = dma.vmem_to_hbm [thread:$0]  %s2001, 8192, %s3, [#allocation5], 256, 256, 16
    $region33: #{tpu_custom_call.1} parent=1 // pred_fallthru
      _
    // Predicated region
    $region34: #{tpu_custom_call.1} parent=1 // pred_check
      _
    $region35: #{tpu_custom_call.1} parent=1 // pred_check_branch
      %2008 = sbr.rel (0) target = $region37
    $region36: #{tpu_custom_call.1} parent=1 // pred_region
      %2009 = dma.done [#allocation5], 8192
    $region37: #{tpu_custom_call.1} parent=1 // pred_fallthru
      _
    %2010 = vsyncpa [#allocation4], 1
    %2011 = vsyncpa [#allocation7], 1
    %2012 = vsyncpa [#allocation5], 1

</llo_original>
